<compile_context>
chip_gen: v7x
topology: tpu7x:2x2x1
jax: 0.10.0
libtpu: 0.0.40
codegen_flags: <defaults>
</compile_context>

<pallas_src>
import jax
import jax.numpy as jnp
from jax import lax
from jax.experimental import pallas as pl
from jax.experimental.pallas import tpu as pltpu

EPS = 1e-5  # PyTorch InstanceNorm2d default


def _largest_tile(C, max_tile):
    """Largest divisor of C that is <= max_tile and a multiple of 8 (else one full tile)."""
    if C <= max_tile:
        return C
    for t in range(max_tile, 7, -1):
        if C % t == 0 and t % 8 == 0:
            return t
    return C


def _vmem_limit_bytes(dtype_bytes, TCI, TCO, HW, kk, k, result_side):
    need = (2 * TCI * HW * dtype_bytes            # x tile, double-buffered
            + 2 * kk * TCO * TCI * dtype_bytes    # weight tile, double-buffered
            + 2 * HW * 4                          # column-index vector
            + 2 * TCO * HW * dtype_bytes          # output tile, double-buffered
            + TCO * HW * 4)                       # resident f32 accumulator
    if not result_side:
        need += k * TCI * HW * dtype_bytes        # per-row stacked activation
    need = int(need * 1.3) + (4 << 20)            # headroom for temporaries / spills
    try:
        cap = int(pltpu.get_tpu_info().vmem_capacity_bytes)
    except Exception:
        cap = 128 << 20
    return min(max(need, 32 << 20), int(cap * 0.85))


def _make_kernel(k, padding, W, HW, result_side):
    kk = k * k

    def kernel(x_ref, w_ref, col_ref, o_ref, acc_ref):
        ci = pl.program_id(2)

        @pl.when(ci == 0)
        def _init():
            acc_ref[...] = jnp.zeros_like(acc_ref)

        # Boundary masks built in-kernel (replaces the old (kk,1,HW) HBM mask input):
        #   row validity  -> comparison on a flat lane iota (no div/mod),
        #   col validity  -> comparison on the prefetched (1,HW) int32 column-index vector.
        j = lax.broadcasted_iota(jnp.int32, (1, HW), 1)
        col = col_ref[...]
        x = x_ref[...]                                   # native dtype, no upcast

        def row_ok(dh):
            if dh < 0:
                return j >= (-dh) * W
            if dh > 0:
                return j < HW - dh * W
            return None

        def col_ok(dw):
            if dw < 0:
                return col >= -dw
            if dw > 0:
                return col < W - dw
            return None

        if result_side:
            # C_out tile <= C_in tile: roll/mask the small f32 (TCO,HW) matmul *result*.
            partial = None
            for t in range(kk):
                dh = t // k - padding
                dw = t % k - padding
                s = dh * W + dw
                p = jnp.dot(w_ref[t], x, preferred_element_type=jnp.float32)
                if s != 0:
                    p = pltpu.roll(p, shift=(-s) % HW, axis=1)
                rm, cm = row_ok(dh), col_ok(dw)
                m = rm if cm is None else (cm if rm is None else rm & cm)
                if m is not None:
                    p = jnp.where(m, p, 0.0)
                partial = p if partial is None else partial + p
            acc_ref[...] += partial
        else:
            # C_out tile > C_in tile: shift/mask the input and fuse the k taps of each kernel
            # row into one deep-K matmul (K = k*TCI); the row mask lands on the small result.
            partial = None
            for r in range(k):
                dh = r - padding
                pieces = []
                for c in range(k):
                    dw = c - padding
                    s = dh * W + dw
                    xs = x if s == 0 else pltpu.roll(x, shift=(-s) % HW, axis=1)
                    cm = col_ok(dw)
                    if cm is not None:
                        xs = jnp.where(cm, xs, jnp.zeros((), xs.dtype))
                    pieces.append(xs)
                stacked = jnp.concatenate(pieces, axis=0)          # (k*TCI, HW)
                p = jnp.dot(w_ref[r], stacked, preferred_element_type=jnp.float32)
                rm = row_ok(dh)
                if rm is not None:
                    p = jnp.where(rm, p, 0.0)
                partial = p if partial is None else partial + p
            acc_ref[...] += partial

        @pl.when(ci == pl.num_programs(2) - 1)
        def _finalize():
            # Two-pass InstanceNorm statistics in f32 (numerically safe).
            acc = acc_ref[...]
            inv_hw = 1.0 / HW
            mean = jnp.sum(acc, axis=-1, keepdims=True) * inv_hw
            centered = acc - mean
            var = jnp.sum(centered * centered, axis=-1, keepdims=True) * inv_hw
            o_ref[...] = (centered * lax.rsqrt(var + EPS)).astype(o_ref.dtype)

    return kernel


def conv_block_forward(x, weight, bias=None, *, kernel_size=3, padding=1, stride=1,
                       matmul_dtype=None):
    """x: (N, C_in, H, W).  weight: (C_out, C_in, k, k).  bias: (C_out,) — elided (see below).

    matmul_dtype: optionally cast matmul operands (e.g. jnp.bfloat16) for higher MXU peak on
    v6e/v7x; accumulation stays f32.  Default keeps the input dtype (exact vs the reference).
    """
    N, C_in, H, W = x.shape
    C_out = weight.shape[0]
    k = kernel_size
    if stride != 1 or 2 * padding != k - 1:
        raise NotImplementedError("only stride=1 'same' convolutions are supported")

    # Conv2d bias is a per-channel constant; InstanceNorm2d(affine=False) subtracts the
    # per-channel mean, so the bias cancels exactly and is intentionally not applied.
    del bias

    HW = H * W
    kk = k * k

    # ---- channel tiling (zero-pad C_in if it does not divide cleanly) ----
    if C_in <= 256:
        TCI, C_in_p = C_in, C_in
    elif C_in % 256 == 0:
        TCI, C_in_p = 256, C_in
    elif C_in % 128 == 0:
        TCI, C_in_p = 128, C_in
    else:
        TCI = 128
        C_in_p = ((C_in + 127) // 128) * 128
    n_ci = C_in_p // TCI

    TCO = _largest_tile(C_out, 256)
    n_co = C_out // TCO

    x2 = x.reshape(N, C_in, HW)
    w = weight
    if C_in_p != C_in:
        x2 = jnp.pad(x2, ((0, 0), (0, C_in_p - C_in), (0, 0)))
        w = jnp.pad(w, ((0, 0), (0, C_in_p - C_in), (0, 0), (0, 0)))

    if matmul_dtype is not None:
        x2 = x2.astype(matmul_dtype)
        w = w.astype(matmul_dtype)

    result_side = TCO <= TCI
    if result_side:
        # Per-tap weight matrices: (kk, C_out, C_in_p), tap index t = kh*k + kw.
        w_arr = jnp.transpose(w, (2, 3, 0, 1)).reshape(kk, C_out, C_in_p)
        w_spec = pl.BlockSpec((kk, TCO, TCI), lambda n, co, ci: (0, co, ci))
    else:
        # Per-kernel-row stacked weights: (n_ci, k, C_out, k*TCI), last dim = (kw, c_local).
        w_arr = jnp.transpose(w.reshape(C_out, n_ci, TCI, k, k),
                              (1, 3, 0, 4, 2)).reshape(n_ci, k, C_out, k * TCI)
        w_spec = pl.BlockSpec((pl.Squeezed(), k, TCO, k * TCI),
                              lambda n, co, ci: (ci, 0, co, 0))

    # Single small int32 column-index vector (j % W), used for column-validity comparisons.
    col_idx = (jnp.arange(HW, dtype=jnp.int32) % W).reshape(1, HW)

    kernel = _make_kernel(k, padding, W, HW, result_side)
    vmem_limit = _vmem_limit_bytes(x2.dtype.itemsize, TCI, TCO, HW, kk, k, result_side)

    out = pl.pallas_call(
        kernel,
        out_shape=jax.ShapeDtypeStruct((N, C_out, HW), x.dtype),
        grid_spec=pltpu.PrefetchScalarGridSpec(
            num_scalar_prefetch=0,
            grid=(N, n_co, n_ci),
            in_specs=[
                pl.BlockSpec((pl.Squeezed(), TCI, HW), lambda n, co, ci: (n, ci, 0)),
                w_spec,
                pl.BlockSpec((1, HW), lambda n, co, ci: (0, 0)),
            ],
            out_specs=pl.BlockSpec((pl.Squeezed(), TCO, HW), lambda n, co, ci: (n, co, 0)),
            scratch_shapes=[pltpu.VMEM((TCO, HW), jnp.float32)],
        ),
        compiler_params=pltpu.CompilerParams(
            dimension_semantics=("parallel", "parallel", "arbitrary"),
            vmem_limit_bytes=vmem_limit,
        ),
    )(x2, w_arr, col_idx)

    return out.reshape(N, C_out, H, W)


def _reference(x, weight, bias, *, padding=1, stride=1):
    y = lax.conv_general_dilated(
        x.astype(jnp.float32), weight.astype(jnp.float32),
        window_strides=(stride, stride),
        padding=[(padding, padding), (padding, padding)],
        dimension_numbers=("NCHW", "OIHW", "NCHW"),
    ) + bias.reshape(1, -1, 1, 1)
    mean = jnp.mean(y, axis=(2, 3), keepdims=True)
    var = jnp.mean((y - mean) ** 2, axis=(2, 3), keepdims=True)
    return (y - mean) * lax.rsqrt(var + EPS)


if __name__ == "__main__":
    # Small shapes consistent with the module defaults (k=3, p=1, s=1).
    N, C_in, C_out, H, W = 2, 4, 4, 16, 16
    k = 3

    key = jax.random.PRNGKey(0)
    kx, kwt, kb = jax.random.split(key, 3)
    x = jax.random.normal(kx, (N, C_in, H, W), dtype=jnp.float32)

    # Deterministic parameter init (PyTorch-like uniform(-bound, bound)).
    fan_in = C_in * k * k
    bound = 1.0 / (fan_in ** 0.5)
    weight = jax.random.uniform(kwt, (C_out, C_in, k, k), jnp.float32, -bound, bound)
    bias = jax.random.uniform(kb, (C_out,), jnp.float32, -bound, bound)

    out = conv_block_forward(x, weight, bias, kernel_size=k, padding=1, stride=1)
    out = jax.block_until_ready(out)

    ref = _reference(x, weight, bias, padding=1, stride=1)
    assert out.shape == (N, C_out, H, W)
    assert jnp.allclose(out, ref, atol=1e-4, rtol=1e-4), "mismatch vs reference"

    print("KERNEL_OK")
</pallas_src>

<mosaic_0001>
module attributes {stable_mosaic.version = 11 : i64} {
  func.func @kernel(%arg0: i32, %arg1: i32, %arg2: i32, %arg3: memref<1x4x256xf32, #tpu.memory_space<vmem>>, %arg4: memref<9x4x4xf32, #tpu.memory_space<vmem>>, %arg5: memref<1x256xi32, #tpu.memory_space<vmem>>, %arg6: memref<1x4x256xf32, #tpu.memory_space<vmem>>, %arg7: memref<4x256xf32, #tpu.memory_space<vmem>>) attributes {dimension_semantics = [#tpu.dimension_semantics<parallel>, #tpu.dimension_semantics<parallel>, #tpu.dimension_semantics<arbitrary>], iteration_bounds = array<i64: 2, 1, 1>, scalar_prefetch = 0 : i64, scratch_operands = 1 : i64, tpu.core_type = #tpu.core_type<tc>, window_params = [{transform_indices = @transform_0, window_bounds = array<i64: 1, 4, 256>}, {transform_indices = @transform_1, window_bounds = array<i64: 9, 4, 4>}, {pipeline_mode = #tpu.pipeline_mode<synchronous>, transform_indices = @transform_2, window_bounds = array<i64: 1, 256>}, {transform_indices = @transform_3, window_bounds = array<i64: 1, 4, 256>}]} {
    %c0_i32 = arith.constant 0 : i32
    %0 = arith.cmpi eq, %arg2, %c0_i32 : i32
    %1 = arith.extui %0 : i1 to i32
    %c0_i32_0 = arith.constant 0 : i32
    %2 = arith.cmpi ne, %1, %c0_i32_0 : i32
    scf.if %2 {
      %cst_58 = arith.constant 0.000000e+00 : f32
      %116 = vector.broadcast %cst_58 : f32 to vector<4x256xf32>
      %c0_59 = arith.constant 0 : index
      %c0_60 = arith.constant 0 : index
      %117 = vector.load %arg7[%c0_59, %c0_60] : memref<4x256xf32, #tpu.memory_space<vmem>>, vector<4x256xf32>
      tpu.vector_store %arg7[%c0_59, %c0_60], %116 {strides = array<i32>} : memref<4x256xf32, #tpu.memory_space<vmem>>, vector<4x256xf32>,
    } else {
    }
    %3 = tpu.iota {dimensions = array<i32: 1>} : vector<1x256xi32>
    %c0 = arith.constant 0 : index
    %c0_1 = arith.constant 0 : index
    %4 = vector.load %arg5[%c0, %c0_1] : memref<1x256xi32, #tpu.memory_space<vmem>>, vector<1x256xi32>
    %c0_2 = arith.constant 0 : index
    %c0_3 = arith.constant 0 : index
    %c0_4 = arith.constant 0 : index
    %5 = vector.load %arg3[%c0_2, %c0_3, %c0_4] : memref<1x4x256xf32, #tpu.memory_space<vmem>>, vector<1x4x256xf32>
    %6 = vector.shape_cast %5 : vector<1x4x256xf32> to vector<4x256xf32>
    %c0_5 = arith.constant 0 : index
    %c0_6 = arith.constant 0 : index
    %c0_7 = arith.constant 0 : index
    %7 = vector.load %arg4[%c0_5, %c0_6, %c0_7] : memref<9x4x4xf32, #tpu.memory_space<vmem>>, vector<1x4x4xf32>
    %8 = vector.shape_cast %7 : vector<1x4x4xf32> to vector<4x4xf32>
    %cst = arith.constant dense<0.000000e+00> : vector<4x256xf32>
    %9 = tpu.matmul %8, %6, %cst {dimension_numbers = #tpu.dot_dimension_numbers<[1], [0], [0], [1], [0, 0, 1, 1], [], []>} : vector<4x4xf32>, vector<4x256xf32>, vector<4x256xf32> -> vector<4x256xf32>
    %c17_i32 = arith.constant 17 : i32
    %10 = tpu.dynamic_rotate %9 by %c17_i32 dim 1 : vector<4x256xf32>, i32 -> vector<4x256xf32>
    %c16_i32 = arith.constant 16 : i32
    %11 = vector.broadcast %c16_i32 : i32 to vector<1x256xi32>
    %12 = arith.cmpi sge, %3, %11 : vector<1x256xi32>
    %c1_i32 = arith.constant 1 : i32
    %13 = vector.broadcast %c1_i32 : i32 to vector<1x256xi32>
    %14 = arith.cmpi sge, %4, %13 : vector<1x256xi32>
    %15 = arith.andi %12, %14 : vector<1x256xi1>
    %cst_8 = arith.constant 0.000000e+00 : f32
    %16 = vector.shape_cast %15 : vector<1x256xi1> to vector<1x256xi1>
    %17 = vector.broadcast %16 : vector<1x256xi1> to vector<4x256xi1>
    %18 = vector.broadcast %cst_8 : f32 to vector<4x256xf32>
    %19 = arith.select %17, %10, %18 : vector<4x256xi1>, vector<4x256xf32>
    %c1 = arith.constant 1 : index
    %c0_9 = arith.constant 0 : index
    %c0_10 = arith.constant 0 : index
    %20 = vector.load %arg4[%c1, %c0_9, %c0_10] : memref<9x4x4xf32, #tpu.memory_space<vmem>>, vector<1x4x4xf32>
    %21 = vector.shape_cast %20 : vector<1x4x4xf32> to vector<4x4xf32>
    %cst_11 = arith.constant dense<0.000000e+00> : vector<4x256xf32>
    %22 = tpu.matmul %21, %6, %cst_11 {dimension_numbers = #tpu.dot_dimension_numbers<[1], [0], [0], [1], [0, 0, 1, 1], [], []>} : vector<4x4xf32>, vector<4x256xf32>, vector<4x256xf32> -> vector<4x256xf32>
    %c16_i32_12 = arith.constant 16 : i32
    %23 = tpu.dynamic_rotate %22 by %c16_i32_12 dim 1 : vector<4x256xf32>, i32 -> vector<4x256xf32>
    %c16_i32_13 = arith.constant 16 : i32
    %24 = vector.broadcast %c16_i32_13 : i32 to vector<1x256xi32>
    %25 = arith.cmpi sge, %3, %24 : vector<1x256xi32>
    %cst_14 = arith.constant 0.000000e+00 : f32
    %26 = vector.shape_cast %25 : vector<1x256xi1> to vector<1x256xi1>
    %27 = vector.broadcast %26 : vector<1x256xi1> to vector<4x256xi1>
    %28 = vector.broadcast %cst_14 : f32 to vector<4x256xf32>
    %29 = arith.select %27, %23, %28 : vector<4x256xi1>, vector<4x256xf32>
    %30 = arith.addf %19, %29 : vector<4x256xf32>
    %c2 = arith.constant 2 : index
    %c0_15 = arith.constant 0 : index
    %c0_16 = arith.constant 0 : index
    %31 = vector.load %arg4[%c2, %c0_15, %c0_16] : memref<9x4x4xf32, #tpu.memory_space<vmem>>, vector<1x4x4xf32>
    %32 = vector.shape_cast %31 : vector<1x4x4xf32> to vector<4x4xf32>
    %cst_17 = arith.constant dense<0.000000e+00> : vector<4x256xf32>
    %33 = tpu.matmul %32, %6, %cst_17 {dimension_numbers = #tpu.dot_dimension_numbers<[1], [0], [0], [1], [0, 0, 1, 1], [], []>} : vector<4x4xf32>, vector<4x256xf32>, vector<4x256xf32> -> vector<4x256xf32>
    %c15_i32 = arith.constant 15 : i32
    %34 = tpu.dynamic_rotate %33 by %c15_i32 dim 1 : vector<4x256xf32>, i32 -> vector<4x256xf32>
    %c16_i32_18 = arith.constant 16 : i32
    %35 = vector.broadcast %c16_i32_18 : i32 to vector<1x256xi32>
    %36 = arith.cmpi sge, %3, %35 : vector<1x256xi32>
    %c15_i32_19 = arith.constant 15 : i32
    %37 = vector.broadcast %c15_i32_19 : i32 to vector<1x256xi32>
    %38 = arith.cmpi slt, %4, %37 : vector<1x256xi32>
    %39 = arith.andi %36, %38 : vector<1x256xi1>
    %cst_20 = arith.constant 0.000000e+00 : f32
    %40 = vector.shape_cast %39 : vector<1x256xi1> to vector<1x256xi1>
    %41 = vector.broadcast %40 : vector<1x256xi1> to vector<4x256xi1>
    %42 = vector.broadcast %cst_20 : f32 to vector<4x256xf32>
    %43 = arith.select %41, %34, %42 : vector<4x256xi1>, vector<4x256xf32>
    %44 = arith.addf %30, %43 : vector<4x256xf32>
    %c3 = arith.constant 3 : index
    %c0_21 = arith.constant 0 : index
    %c0_22 = arith.constant 0 : index
    %45 = vector.load %arg4[%c3, %c0_21, %c0_22] : memref<9x4x4xf32, #tpu.memory_space<vmem>>, vector<1x4x4xf32>
    %46 = vector.shape_cast %45 : vector<1x4x4xf32> to vector<4x4xf32>
    %cst_23 = arith.constant dense<0.000000e+00> : vector<4x256xf32>
    %47 = tpu.matmul %46, %6, %cst_23 {dimension_numbers = #tpu.dot_dimension_numbers<[1], [0], [0], [1], [0, 0, 1, 1], [], []>} : vector<4x4xf32>, vector<4x256xf32>, vector<4x256xf32> -> vector<4x256xf32>
    %c1_i32_24 = arith.constant 1 : i32
    %48 = tpu.dynamic_rotate %47 by %c1_i32_24 dim 1 : vector<4x256xf32>, i32 -> vector<4x256xf32>
    %c1_i32_25 = arith.constant 1 : i32
    %49 = vector.broadcast %c1_i32_25 : i32 to vector<1x256xi32>
    %50 = arith.cmpi sge, %4, %49 : vector<1x256xi32>
    %cst_26 = arith.constant 0.000000e+00 : f32
    %51 = vector.shape_cast %50 : vector<1x256xi1> to vector<1x256xi1>
    %52 = vector.broadcast %51 : vector<1x256xi1> to vector<4x256xi1>
    %53 = vector.broadcast %cst_26 : f32 to vector<4x256xf32>
    %54 = arith.select %52, %48, %53 : vector<4x256xi1>, vector<4x256xf32>
    %55 = arith.addf %44, %54 : vector<4x256xf32>
    %c4 = arith.constant 4 : index
    %c0_27 = arith.constant 0 : index
    %c0_28 = arith.constant 0 : index
    %56 = vector.load %arg4[%c4, %c0_27, %c0_28] : memref<9x4x4xf32, #tpu.memory_space<vmem>>, vector<1x4x4xf32>
    %57 = vector.shape_cast %56 : vector<1x4x4xf32> to vector<4x4xf32>
    %cst_29 = arith.constant dense<0.000000e+00> : vector<4x256xf32>
    %58 = tpu.matmul %57, %6, %cst_29 {dimension_numbers = #tpu.dot_dimension_numbers<[1], [0], [0], [1], [0, 0, 1, 1], [], []>} : vector<4x4xf32>, vector<4x256xf32>, vector<4x256xf32> -> vector<4x256xf32>
    %59 = arith.addf %55, %58 : vector<4x256xf32>
    %c5 = arith.constant 5 : index
    %c0_30 = arith.constant 0 : index
    %c0_31 = arith.constant 0 : index
    %60 = vector.load %arg4[%c5, %c0_30, %c0_31] : memref<9x4x4xf32, #tpu.memory_space<vmem>>, vector<1x4x4xf32>
    %61 = vector.shape_cast %60 : vector<1x4x4xf32> to vector<4x4xf32>
    %cst_32 = arith.constant dense<0.000000e+00> : vector<4x256xf32>
    %62 = tpu.matmul %61, %6, %cst_32 {dimension_numbers = #tpu.dot_dimension_numbers<[1], [0], [0], [1], [0, 0, 1, 1], [], []>} : vector<4x4xf32>, vector<4x256xf32>, vector<4x256xf32> -> vector<4x256xf32>
    %c255_i32 = arith.constant 255 : i32
    %63 = tpu.dynamic_rotate %62 by %c255_i32 dim 1 : vector<4x256xf32>, i32 -> vector<4x256xf32>
    %c15_i32_33 = arith.constant 15 : i32
    %64 = vector.broadcast %c15_i32_33 : i32 to vector<1x256xi32>
    %65 = arith.cmpi slt, %4, %64 : vector<1x256xi32>
    %cst_34 = arith.constant 0.000000e+00 : f32
    %66 = vector.shape_cast %65 : vector<1x256xi1> to vector<1x256xi1>
    %67 = vector.broadcast %66 : vector<1x256xi1> to vector<4x256xi1>
    %68 = vector.broadcast %cst_34 : f32 to vector<4x256xf32>
    %69 = arith.select %67, %63, %68 : vector<4x256xi1>, vector<4x256xf32>
    %70 = arith.addf %59, %69 : vector<4x256xf32>
    %c6 = arith.constant 6 : index
    %c0_35 = arith.constant 0 : index
    %c0_36 = arith.constant 0 : index
    %71 = vector.load %arg4[%c6, %c0_35, %c0_36] : memref<9x4x4xf32, #tpu.memory_space<vmem>>, vector<1x4x4xf32>
    %72 = vector.shape_cast %71 : vector<1x4x4xf32> to vector<4x4xf32>
    %cst_37 = arith.constant dense<0.000000e+00> : vector<4x256xf32>
    %73 = tpu.matmul %72, %6, %cst_37 {dimension_numbers = #tpu.dot_dimension_numbers<[1], [0], [0], [1], [0, 0, 1, 1], [], []>} : vector<4x4xf32>, vector<4x256xf32>, vector<4x256xf32> -> vector<4x256xf32>
    %c241_i32 = arith.constant 241 : i32
    %74 = tpu.dynamic_rotate %73 by %c241_i32 dim 1 : vector<4x256xf32>, i32 -> vector<4x256xf32>
    %c240_i32 = arith.constant 240 : i32
    %75 = vector.broadcast %c240_i32 : i32 to vector<1x256xi32>
    %76 = arith.cmpi slt, %3, %75 : vector<1x256xi32>
    %c1_i32_38 = arith.constant 1 : i32
    %77 = vector.broadcast %c1_i32_38 : i32 to vector<1x256xi32>
    %78 = arith.cmpi sge, %4, %77 : vector<1x256xi32>
    %79 = arith.andi %76, %78 : vector<1x256xi1>
    %cst_39 = arith.constant 0.000000e+00 : f32
    %80 = vector.shape_cast %79 : vector<1x256xi1> to vector<1x256xi1>
    %81 = vector.broadcast %80 : vector<1x256xi1> to vector<4x256xi1>
    %82 = vector.broadcast %cst_39 : f32 to vector<4x256xf32>
    %83 = arith.select %81, %74, %82 : vector<4x256xi1>, vector<4x256xf32>
    %84 = arith.addf %70, %83 : vector<4x256xf32>
    %c7 = arith.constant 7 : index
    %c0_40 = arith.constant 0 : index
    %c0_41 = arith.constant 0 : index
    %85 = vector.load %arg4[%c7, %c0_40, %c0_41] : memref<9x4x4xf32, #tpu.memory_space<vmem>>, vector<1x4x4xf32>
    %86 = vector.shape_cast %85 : vector<1x4x4xf32> to vector<4x4xf32>
    %cst_42 = arith.constant dense<0.000000e+00> : vector<4x256xf32>
    %87 = tpu.matmul %86, %6, %cst_42 {dimension_numbers = #tpu.dot_dimension_numbers<[1], [0], [0], [1], [0, 0, 1, 1], [], []>} : vector<4x4xf32>, vector<4x256xf32>, vector<4x256xf32> -> vector<4x256xf32>
    %c240_i32_43 = arith.constant 240 : i32
    %88 = tpu.dynamic_rotate %87 by %c240_i32_43 dim 1 : vector<4x256xf32>, i32 -> vector<4x256xf32>
    %c240_i32_44 = arith.constant 240 : i32
    %89 = vector.broadcast %c240_i32_44 : i32 to vector<1x256xi32>
    %90 = arith.cmpi slt, %3, %89 : vector<1x256xi32>
    %cst_45 = arith.constant 0.000000e+00 : f32
    %91 = vector.shape_cast %90 : vector<1x256xi1> to vector<1x256xi1>
    %92 = vector.broadcast %91 : vector<1x256xi1> to vector<4x256xi1>
    %93 = vector.broadcast %cst_45 : f32 to vector<4x256xf32>
    %94 = arith.select %92, %88, %93 : vector<4x256xi1>, vector<4x256xf32>
    %95 = arith.addf %84, %94 : vector<4x256xf32>
    %c8 = arith.constant 8 : index
    %c0_46 = arith.constant 0 : index
    %c0_47 = arith.constant 0 : index
    %96 = vector.load %arg4[%c8, %c0_46, %c0_47] : memref<9x4x4xf32, #tpu.memory_space<vmem>>, vector<1x4x4xf32>
    %97 = vector.shape_cast %96 : vector<1x4x4xf32> to vector<4x4xf32>
    %cst_48 = arith.constant dense<0.000000e+00> : vector<4x256xf32>
    %98 = tpu.matmul %97, %6, %cst_48 {dimension_numbers = #tpu.dot_dimension_numbers<[1], [0], [0], [1], [0, 0, 1, 1], [], []>} : vector<4x4xf32>, vector<4x256xf32>, vector<4x256xf32> -> vector<4x256xf32>
    %c239_i32 = arith.constant 239 : i32
    %99 = tpu.dynamic_rotate %98 by %c239_i32 dim 1 : vector<4x256xf32>, i32 -> vector<4x256xf32>
    %c240_i32_49 = arith.constant 240 : i32
    %100 = vector.broadcast %c240_i32_49 : i32 to vector<1x256xi32>
    %101 = arith.cmpi slt, %3, %100 : vector<1x256xi32>
    %c15_i32_50 = arith.constant 15 : i32
    %102 = vector.broadcast %c15_i32_50 : i32 to vector<1x256xi32>
    %103 = arith.cmpi slt, %4, %102 : vector<1x256xi32>
    %104 = arith.andi %101, %103 : vector<1x256xi1>
    %cst_51 = arith.constant 0.000000e+00 : f32
    %105 = vector.shape_cast %104 : vector<1x256xi1> to vector<1x256xi1>
    %106 = vector.broadcast %105 : vector<1x256xi1> to vector<4x256xi1>
    %107 = vector.broadcast %cst_51 : f32 to vector<4x256xf32>
    %108 = arith.select %106, %99, %107 : vector<4x256xi1>, vector<4x256xf32>
    %109 = arith.addf %95, %108 : vector<4x256xf32>
    %c0_52 = arith.constant 0 : index
    %c0_53 = arith.constant 0 : index
    %110 = vector.load %arg7[%c0_52, %c0_53] : memref<4x256xf32, #tpu.memory_space<vmem>>, vector<4x256xf32>
    %111 = arith.addf %110, %109 : vector<4x256xf32>
    %c0_54 = arith.constant 0 : index
    %c0_55 = arith.constant 0 : index
    %112 = vector.load %arg7[%c0_54, %c0_55] : memref<4x256xf32, #tpu.memory_space<vmem>>, vector<4x256xf32>
    tpu.vector_store %arg7[%c0_54, %c0_55], %111 {strides = array<i32>} : memref<4x256xf32, #tpu.memory_space<vmem>>, vector<4x256xf32>,
    %c0_i32_56 = arith.constant 0 : i32
    %113 = arith.cmpi eq, %arg2, %c0_i32_56 : i32
    %114 = arith.extui %113 : i1 to i32
    %c0_i32_57 = arith.constant 0 : i32
    %115 = arith.cmpi ne, %114, %c0_i32_57 : i32
    scf.if %115 {
      %c0_58 = arith.constant 0 : index
      %c0_59 = arith.constant 0 : index
      %116 = vector.load %arg7[%c0_58, %c0_59] : memref<4x256xf32, #tpu.memory_space<vmem>>, vector<4x256xf32>
      %cst_60 = arith.constant dense<0.000000e+00> : vector<4xf32>
      %117 = vector.multi_reduction <add>, %116, %cst_60 [1] : vector<4x256xf32> to vector<4xf32>
      %118 = vector.shape_cast %117 : vector<4xf32> to vector<4x1xf32>
      %cst_61 = arith.constant 3.906250e-03 : f32
      %119 = vector.broadcast %cst_61 : f32 to vector<4x1xf32>
      %120 = arith.mulf %118, %119 : vector<4x1xf32>
      %121 = vector.broadcast %120 : vector<4x1xf32> to vector<4x256xf32>
      %122 = arith.subf %116, %121 : vector<4x256xf32>
      %123 = arith.mulf %122, %122 : vector<4x256xf32>
      %cst_62 = arith.constant dense<0.000000e+00> : vector<4xf32>
      %124 = vector.multi_reduction <add>, %123, %cst_62 [1] : vector<4x256xf32> to vector<4xf32>
      %125 = vector.shape_cast %124 : vector<4xf32> to vector<4x1xf32>
      %cst_63 = arith.constant 3.906250e-03 : f32
      %126 = vector.broadcast %cst_63 : f32 to vector<4x1xf32>
      %127 = arith.mulf %125, %126 : vector<4x1xf32>
      %cst_64 = arith.constant 9.99999974E-6 : f32
      %128 = vector.broadcast %cst_64 : f32 to vector<4x1xf32>
      %129 = arith.addf %127, %128 : vector<4x1xf32>
      %130 = math.rsqrt %129 : vector<4x1xf32>
      %131 = vector.broadcast %130 : vector<4x1xf32> to vector<4x256xf32>
      %132 = arith.mulf %122, %131 : vector<4x256xf32>
      %c0_65 = arith.constant 0 : index
      %c0_66 = arith.constant 0 : index
      %c0_67 = arith.constant 0 : index
      %133 = vector.load %arg6[%c0_65, %c0_66, %c0_67] : memref<1x4x256xf32, #tpu.memory_space<vmem>>, vector<1x4x256xf32>
      %134 = vector.shape_cast %133 : vector<1x4x256xf32> to vector<4x256xf32>
      %135 = vector.shape_cast %132 : vector<4x256xf32> to vector<1x4x256xf32>
      tpu.vector_store %arg6[%c0_65, %c0_66, %c0_67], %135 {strides = array<i32>} : memref<1x4x256xf32, #tpu.memory_space<vmem>>, vector<1x4x256xf32>,
    } else {
    }
    return
  }
  func.func @transform_0(%arg0: i32, %arg1: i32, %arg2: i32) -> (i32, i32, i32) {
    %c0_i32 = arith.constant 0 : i32
    %c0_i32_0 = arith.constant 0 : i32
    return %arg0, %arg2, %c0_i32 : i32, i32, i32
  }
  func.func @transform_1(%arg0: i32, %arg1: i32, %arg2: i32) -> (i32, i32, i32) {
    %c0_i32 = arith.constant 0 : i32
    %c0_i32_0 = arith.constant 0 : i32
    return %c0_i32, %arg1, %arg2 : i32, i32, i32
  }
  func.func @transform_2(%arg0: i32, %arg1: i32, %arg2: i32) -> (i32, i32) {
    %c0_i32 = arith.constant 0 : i32
    %c0_i32_0 = arith.constant 0 : i32
    %c0_i32_1 = arith.constant 0 : i32
    return %c0_i32, %c0_i32_0 : i32, i32
  }
  func.func @transform_3(%arg0: i32, %arg1: i32, %arg2: i32) -> (i32, i32, i32) {
    %c0_i32 = arith.constant 0 : i32
    %c0_i32_0 = arith.constant 0 : i32
    return %arg0, %arg1, %c0_i32 : i32, i32, i32
  }
}

</mosaic_0001>

<llo_original>
// kernel: tpu_custom_call.1
$region0: #{tpu_custom_call.1}
  #allocation0 [shape = 'u32[]', space=smem, size = 0x4, offset = 0x4, fixed_abs, tag = 'smem constant byte address 0x4 - core index']
  #allocation1 [shape = 'u32[144,128]{1,0:T(1,128)}', space=vmem, size = 0x12000, scoped, tag = 'internal scratch']
  #allocation2 [shape = 'f32[4,256]{1,0:T(4,128)}', space=vmem, size = 0x1000, scoped, tag = 'scratch operand']
  %s0 = inlined_call_operand.vmem [shape: f32[2,4,256], index: 0, kind: input, shape index: {}]
  %s1 = inlined_call_operand.vmem [shape: f32[9,4,4], index: 1, kind: input, shape index: {}]
  %s2 = inlined_call_operand.vmem [shape: s32[1,256], index: 2, kind: input, shape index: {}]
  %s3 = inlined_call_operand.hbm [shape: f32[2,4,256], index: 3, kind: output, shape index: {}]
  %s4 = sld [smem:[#allocation0]]
  $region53: #{tpu_custom_call.1} parent=0
    _
  %s6 = ssub.s32 1, %s4
  %s7 = scalar_select 0, %s6, %s4
  $region1: #{tpu_custom_call.1} parent=0
    #allocation3 [shape = 'u8[8192]{0}', space=vmem, size = 0x2000, scoped, tag = 'output window, operand 0']
    #allocation4 [shape = 's32[2]{0}', space=sflag, size = 0x8, scoped, tag = 'scoped memory for tpu_custom_call.1']
    %8 = vsyncpa [#allocation4], 0
    %s9 = scalar_lea.sflag [#allocation4], 1
    %10 = vsyncpa %s9, 0
    loop: start=0, step=1, limit=4
    $region2: #{tpu_custom_call.1} parent=1 // loop_pre_header
      _
    $region3: #{tpu_custom_call.1} parent=1 // loop_header
      %s12 = sphi 0, %s16
      %p13 = scmp.ge.s32.totalorder %s12, 4
      %s19 = sphi 0, %s38
      %s20 = sphi 0, %s34
      %s21 = sphi 0, %s30
      %s22 = sphi 0, %s19
      %s23 = sphi 0, %s20
      %s24 = sphi 0, %s21
      %s25 = sphi 0, %s22
      %s26 = sphi 0, %s23
      %s27 = sphi 0, %s24
      %s43 = sphi 0, %s45
      %s46 = sphi 0, %s43
      %s47 = sphi 0, %s46
      %s63 = sphi 0, %s47
      %s71 = sphi 0, %s73
      %s74 = sphi 0, %s71
      %s75 = sphi 0, %s74
      %s91 = sphi 0, %s75
      %s95 = sphi 0, %s95
      %s97 = sphi 0, %s95
      %s98 = sphi 0, %s97
      %s112 = sphi 0, %s98
      %s120 = sphi 0, %s122
      %s123 = sphi 0, %s120
      %s124 = sphi 0, %s123
      %s140 = sphi 0, %s124
    $region4: #{tpu_custom_call.1} parent=1 // loop_header_branch
      %15 = sbr.rel (%p13) target = $region8
    $region5: #{tpu_custom_call.1} parent=1 // loop_body
      %s17 = ssub.s32 %s12, 1
      %s18 = ssub.s32 %s12, 2
      %s28 = sadd.s32 1, %s21
      %p29 = scmp.ge.s32.totalorder %s28, 1
      %s30 = scalar_select %p29, 0, %s28
      %s31 = sadd.s32 1, %s20
      %s32 = scalar_select %p29, %s31, %s20
      %p33 = scmp.ge.s32.totalorder %s32, 1
      %s34 = scalar_select %p33, 0, %s32
      %s35 = sadd.s32 1, %s19
      %s36 = scalar_select %p33, %s35, %s19
      %p37 = scmp.ge.s32.totalorder %s36, 2
      %s38 = scalar_select %p37, 0, %s36
      %s39 = ssub.s32 %s19, %s38
      %s40 = ssub.s32 %s21, %s30
      %s41 = sor.u32 %s39, %s40
      %p42 = scmp.eq.s32.totalorder %s41, 0
      %s44 = sadd.s32 %s43, 1
      %s45 = scalar_select %p42, %s43, %s44
      %p48 = pneg %p42
      %p49 = scmp.eq.s32.totalorder %s12, 1
      %p50 = por %p48, %p49
      %p51 = scmp.ne.s32.totalorder %s43, %s46
      %p52 = scmp.eq.s32.totalorder %s12, 0
      %p53 = por %p51, %p52
      %p54 = scmp.ne.s32.totalorder %s43, %s46
      %p55 = scmp.eq.s32.totalorder %s17, 1
      %p56 = por %p54, %p55
      %p57 = scmp.ne.s32.totalorder %s46, %s47
      %p58 = scmp.eq.s32.totalorder %s17, 0
      %p59 = por %p57, %p58
      %p60 = scmp.ne.s32.totalorder %s46, %s47
      %p61 = scmp.eq.s32.totalorder %s18, 1
      %p62 = por %p60, %p61
      %p64 = scmp.ne.s32.totalorder %s47, %s63
      %p65 = scmp.eq.s32.totalorder %s18, 0
      %p66 = por %p64, %p65
      %s67 = ssub.s32 %s20, %s34
      %s68 = ssub.s32 %s21, %s30
      %s69 = sor.u32 %s67, %s68
      %p70 = scmp.eq.s32.totalorder %s69, 0
      %s72 = sadd.s32 %s71, 1
      %s73 = scalar_select %p70, %s71, %s72
      %p76 = pneg %p70
      %p77 = scmp.eq.s32.totalorder %s12, 1
      %p78 = por %p76, %p77
      %p79 = scmp.ne.s32.totalorder %s71, %s74
      %p80 = scmp.eq.s32.totalorder %s12, 0
      %p81 = por %p79, %p80
      %p82 = scmp.ne.s32.totalorder %s71, %s74
      %p83 = scmp.eq.s32.totalorder %s17, 1
      %p84 = por %p82, %p83
      %p85 = scmp.ne.s32.totalorder %s74, %s75
      %p86 = scmp.eq.s32.totalorder %s17, 0
      %p87 = por %p85, %p86
      %p88 = scmp.ne.s32.totalorder %s74, %s75
      %p89 = scmp.eq.s32.totalorder %s18, 1
      %p90 = por %p88, %p89
      %p92 = scmp.ne.s32.totalorder %s75, %s91
      %p93 = scmp.eq.s32.totalorder %s18, 0
      %p94 = por %p92, %p93
      %s96 = sadd.s32 %s95, 1
      %p99 = scmp.eq.s32.totalorder %s12, 1
      %p100 = scmp.ne.s32.totalorder %s95, %s97
      %p101 = scmp.eq.s32.totalorder %s12, 0
      %p102 = por %p100, %p101
      %p103 = scmp.ne.s32.totalorder %s95, %s97
      %p104 = scmp.eq.s32.totalorder %s17, 1
      %p105 = por %p103, %p104
      %p106 = scmp.ne.s32.totalorder %s97, %s98
      %p107 = scmp.eq.s32.totalorder %s17, 0
      %p108 = por %p106, %p107
      %p109 = scmp.ne.s32.totalorder %s97, %s98
      %p110 = scmp.eq.s32.totalorder %s18, 1
      %p111 = por %p109, %p110
      %p113 = scmp.ne.s32.totalorder %s98, %s112
      %p114 = scmp.eq.s32.totalorder %s18, 0
      %p115 = por %p113, %p114
      %s116 = ssub.s32 %s19, %s38
      %s117 = ssub.s32 %s20, %s34
      %s118 = sor.u32 %s116, %s117
      %p119 = scmp.eq.s32.totalorder %s118, 0
      %s121 = sadd.s32 %s120, 1
      %s122 = scalar_select %p119, %s120, %s121
      %p125 = pneg %p119
      %p126 = scmp.eq.s32.totalorder %s12, 1
      %p127 = por %p125, %p126
      %p128 = scmp.ne.s32.totalorder %s120, %s123
      %p129 = scmp.eq.s32.totalorder %s12, 0
      %p130 = por %p128, %p129
      %p131 = scmp.ne.s32.totalorder %s120, %s123
      %p132 = scmp.eq.s32.totalorder %s17, 1
      %p133 = por %p131, %p132
      %p134 = scmp.ne.s32.totalorder %s123, %s124
      %p135 = scmp.eq.s32.totalorder %s17, 0
      %p136 = por %p134, %p135
      %p137 = scmp.ne.s32.totalorder %s123, %s124
      %p138 = scmp.eq.s32.totalorder %s18, 1
      %p139 = por %p137, %p138
      %p141 = scmp.ne.s32.totalorder %s124, %s140
      %p142 = scmp.eq.s32.totalorder %s18, 0
      %p143 = por %p141, %p142
      %p144 = scmp.le.s32.totalorder 1, %s12
      %p145 = scmp.lt.s32.totalorder %s12, 3
      %p146 = pnand %p144, %p145
      %p147 = pneg %p146
      // Predicated region
      $region9: #{tpu_custom_call.1} parent=5 // pred_check
        _
      $region10: #{tpu_custom_call.1} parent=5 // pred_check_branch
        %149 = sbr.rel (%p146) target = $region12
      $region11: #{tpu_custom_call.1} parent=5 // pred_region
        %s150 = ssub.s32 %s12, 1
        // Predicated region
        $region13: #{tpu_custom_call.1} parent=11 // pred_check
          %p151 = pneg %p87
        $region14: #{tpu_custom_call.1} parent=11 // pred_check_branch
          %153 = sbr.rel (%p151) target = $region16
        $region15: #{tpu_custom_call.1} parent=11 // pred_region
          %p154 = scmp.lt.s32.totalorder %s23, 0
          %s155 = scalar_select %p154, %s23, 0
          %p156 = scmp.lt.s32.totalorder %s24, 0
          %s157 = scalar_select %p156, %s24, 0
          %s158 = sadd.s32 %s157, %s155
          %s159 = smul.addr %s158, 4
          %s160 = scalar_lea.vmem %s1, %s159
        $region16: #{tpu_custom_call.1} parent=11 // pred_fallthru
          _
        // Predicated region
        $region17: #{tpu_custom_call.1} parent=11 // pred_check
          %p161 = pneg %p108
        $region18: #{tpu_custom_call.1} parent=11 // pred_check_branch
          %163 = sbr.rel (%p161) target = $region20
        $region19: #{tpu_custom_call.1} parent=11 // pred_region
          _
        $region20: #{tpu_custom_call.1} parent=11 // pred_fallthru
          _
      $region12: #{tpu_custom_call.1} parent=5 // pred_fallthru
        _
      %p164 = scmp.lt.s32.totalorder %s12, 2
      // Predicated region
      $region21: #{tpu_custom_call.1} parent=5 // pred_check
        %p165 = pneg %p164
      $region22: #{tpu_custom_call.1} parent=5 // pred_check_branch
        %167 = sbr.rel (%p165) target = $region24
      $region23: #{tpu_custom_call.1} parent=5 // pred_region
        // Predicated region
        $region25: #{tpu_custom_call.1} parent=23 // pred_check
          %p168 = pneg %p53
        $region26: #{tpu_custom_call.1} parent=23 // pred_check_branch
          %170 = sbr.rel (%p168) target = $region28
        $region27: #{tpu_custom_call.1} parent=23 // pred_region
          %p171 = scmp.lt.s32.totalorder %s19, 1
          %s172 = scalar_select %p171, %s19, 1
          %p173 = scmp.lt.s32.totalorder %s21, 0
          %s174 = scalar_select %p173, %s21, 0
          %s175 = smul.addr %s174, 2
          %s176 = smul.addr %s172, 2
          %s177 = sadd.s32 %s175, %s176
          %s178 = smul.addr %s177, 4
          %s179 = scalar_lea.vmem %s0, %s178
        $region28: #{tpu_custom_call.1} parent=23 // pred_fallthru
          _
      $region24: #{tpu_custom_call.1} parent=5 // pred_fallthru
        _
      %p180 = scmp.le.s32.totalorder 1, %s12
      %p181 = scmp.lt.s32.totalorder %s12, 3
      %p182 = pnand %p180, %p181
      %p183 = pneg %p182
      // Predicated region
      $region29: #{tpu_custom_call.1} parent=5 // pred_check
        _
      $region30: #{tpu_custom_call.1} parent=5 // pred_check_branch
        %185 = sbr.rel (%p182) target = $region32
      $region31: #{tpu_custom_call.1} parent=5 // pred_region
        %s186 = ssub.s32 %s12, 1
        %p187 = scmp.lt.s32.totalorder %s22, 1
        %s188 = scalar_select %p187, %s22, 1
        %p189 = scmp.lt.s32.totalorder %s24, 0
        %s190 = scalar_select %p189, %s24, 0
        %s191 = smul.addr %s190, 2
        %s192 = smul.addr %s188, 2
        %s193 = sadd.s32 %s191, %s192
        %s194 = smul.addr %s193, 4
        %s195 = scalar_lea.vmem %s0, %s194
        %p196 = pneg %p59
        %p197 = pneg %p56
        %p198 = scmp.lt.s32.totalorder %s23, 0
        %s199 = scalar_select %p198, %s23, 0
        %p200 = scmp.lt.s32.totalorder %s24, 0
        %s201 = scalar_select %p200, %s24, 0
        %s202 = sadd.s32 %s201, %s199
        %s203 = smul.addr %s202, 4
        %s204 = scalar_lea.vmem %s1, %s203
        %p205 = pneg %p87
        %p206 = pneg %p84
        %p207 = pneg %p108
        %p208 = pneg %p105
        %p209 = pneg %p136
        %p210 = pneg %p133
        %s211 = sand.u32 %s123, 1
        %s212 = scalar_lea.sflag [#allocation4], %s211
        %s213 = sand.u32 %s123, 1
        %s214 = smul.addr %s213, 8
        %s215 = scalar_lea.vmem [#allocation3], %s214
        %p216 = scmp.lt.s32.totalorder %s22, 1
        %s217 = scalar_select %p216, %s22, 1
        %p218 = scmp.lt.s32.totalorder %s24, 0
        %s219 = scalar_select %p218, %s24, 0
        %s220 = smul.addr %s219, 2
        %s221 = smul.addr %s217, 2
        %s222 = sadd.s32 %s220, %s221
        %s223 = smul.addr %s222, 4
        %s224 = scalar_lea.vmem %s0, %s223
        %p225 = scmp.lt.s32.totalorder %s23, 0
        %s226 = scalar_select %p225, %s23, 0
        %p227 = scmp.lt.s32.totalorder %s24, 0
        %s228 = scalar_select %p227, %s24, 0
        %s229 = sadd.s32 %s228, %s226
        %s230 = smul.addr %s229, 4
        %s231 = scalar_lea.vmem %s1, %s230
        %p232 = scmp.eq.s32.totalorder %s24, 0
        // Predicated region
        $region33: #{tpu_custom_call.1} parent=31 // pred_check
          %p233 = pneg %p232
        $region34: #{tpu_custom_call.1} parent=31 // pred_check_branch
          %235 = sbr.rel (%p233) target = $region36
        $region35: #{tpu_custom_call.1} parent=31 // pred_region
          %236 = vst [vmem:[#allocation2] sm:$0xff] 0.0
        $region36: #{tpu_custom_call.1} parent=31 // pred_fallthru
          _
        %v237 = vlaneseq
        %v238 = vand.u32 %v237, 127
        %v239 = vadd.s32 %v238, 128
        %v240 = vld [vmem:[%s2] sm:$0x3]
        %v241 = vld [vmem:[%s224] sm:$0xff]
        %v242 = vld [vmem:[%s231] sm:$0xf]
        %v244 = vcombine.high %v241, %v241
        %vm245 = vcmask 31744
        %v247 = vsel %vm245, %v242, 0
        %vm249 = vcmask 1043456
        %v250 = vsel %vm249, %v241, 0
        %v252 = vsel %vm249, %v244, 0
        %254 = vmatprep.subr.mxu0 %v252
        %255 = vmatpush1.msra.mxu0 %v250
        %256 = vmatprep.subr.mxu0 0.0
        %257 = vmatpush1.msra.mxu0 0.0
        %258 = vmatprep.subr.mxu0 0.0
        %259 = vmatpush1.msra.mxu0 0.0
        %260 = vmatprep.subr.mxu0 0.0
        %261 = vmatpush1.msra.mxu0 0.0
        %262 = vmatprep.subr.mxu0 0.0
        %263 = vmatpush1.msra.mxu0 0.0
        %264 = vmatprep.subr.mxu0 0.0
        %265 = vmatpush1.msra.mxu0 0.0
        %266 = vmatprep.subr.mxu0 0.0
        %267 = vmatpush1.msra.mxu0 0.0
        %268 = vmatprep.subr.mxu0 0.0
        %269 = vmatpush1.msra.mxu0 0.0
        %270 = vmatprep.subr.mxu0 0.0
        %271 = vmatpush1.msra.mxu0 0.0
        %272 = vmatprep.subr.mxu0 0.0
        %273 = vmatpush1.msra.mxu0 0.0
        %274 = vmatprep.subr.mxu0 0.0
        %275 = vmatpush1.msra.mxu0 0.0
        %276 = vmatprep.subr.mxu0 0.0
        %277 = vmatpush1.msra.mxu0 0.0
        %278 = vmatprep.subr.mxu0 0.0
        %279 = vmatpush1.msra.mxu0 0.0
        %280 = vmatprep.subr.mxu0 0.0
        %281 = vmatpush1.msra.mxu0 0.0
        %282 = vmatprep.subr.mxu0 0.0
        %283 = vmatpush1.msra.mxu0 0.0
        %284 = vmatprep.subr.mxu0 0.0
        %285 = vmatpush1.msra.mxu0 0.0
        %286 = vmatprep.subr.mxu0 0.0
        %287 = vmatpush1.msra.mxu0 0.0
        %288 = vmatprep.subr.mxu0 0.0
        %289 = vmatpush1.msra.mxu0 0.0
        %290 = vmatprep.subr.mxu0 0.0
        %291 = vmatpush1.msra.mxu0 0.0
        %292 = vmatprep.subr.mxu0 0.0
        %293 = vmatpush1.msra.mxu0 0.0
        %294 = vmatprep.subr.mxu0 0.0
        %295 = vmatpush1.msra.mxu0 0.0
        %296 = vmatprep.subr.mxu0 0.0
        %297 = vmatpush1.msra.mxu0 0.0
        %298 = vmatprep.subr.mxu0 0.0
        %299 = vmatpush1.msra.mxu0 0.0
        %300 = vmatprep.subr.mxu0 0.0
        %301 = vmatpush1.msra.mxu0 0.0
        %302 = vmatprep.subr.mxu0 0.0
        %303 = vmatpush1.msra.mxu0 0.0
        %304 = vmatprep.subr.mxu0 0.0
        %305 = vmatpush1.msra.mxu0 0.0
        %306 = vmatprep.subr.mxu0 0.0
        %307 = vmatpush1.msra.mxu0 0.0
        %308 = vmatprep.subr.mxu0 0.0
        %309 = vmatpush1.msra.mxu0 0.0
        %310 = vmatprep.subr.mxu0 0.0
        %311 = vmatpush1.msra.mxu0 0.0
        %312 = vmatprep.subr.mxu0 0.0
        %313 = vmatpush1.msra.mxu0 0.0
        %314 = vmatprep.subr.mxu0 0.0
        %315 = vmatpush1.msra.mxu0 0.0
        %316 = vmatprep.subr.mxu0 0.0
        %317 = vmatpush1.msra.mxu0 0.0
        %318 = vmatprep.mubr.f32.mxu0 0.0
        %319 = vmatmul.mubr.f32.gmra.mrb[0].mxu0 %v247
        %v320 = vpop.f32.mrb[0].mxu0
        %v321 = vadd.f32 0.0, %v320
        %v322 = vpop.f32.mrb[0].mxu0
        %v323 = vadd.f32 0.0, %v322
        %324 = vdwg.mxu0
        %325 = vrot.lane.b32.xlu0 %v321, 17
        %v326 = vpop.permute.xlu0 %325
        %327 = vrot.lane.b32.xlu0 %v323, 17
        %v328 = vpop.permute.xlu0 %327
        %vm329 = vcmp.lt.s32.totalorder %v238, 17
        %v330 = vsel %vm329, %v326, %v328
        %v331 = vsel %vm329, %v328, %v326
        %vm332 = vcmp.ge.s32.totalorder %v238, 16
        %vm333 = vcmp.ge.s32.totalorder %v239, 16
        %vm334 = vcmp.ge.s32.totalorder %v240, 1
        %v335 = vsel %vm334, 1, 0
        %v336 = vlaneseq
        %v337 = vshrl.u32 %v336, 7
        %v338 = vsub.s32 0, %v337
        %v339 = vrot.slane %v335, %v338
        %v340 = vlaneseq
        %v341 = vshrl.u32 %v340, 7
        %v342 = vsub.s32 1, %v341
        %v343 = vrot.slane %v335, %v342
        %vm344 = vcmp.ne.s32.totalorder %v339, 0
        %vm345 = vcmp.ne.s32.totalorder %v343, 0
        %vm346 = vmand %vm332, %vm344
        %vm347 = vmand %vm333, %vm345
        %v348 = vsel %vm346, 1, 0
        %v349 = vsel %vm347, 1, 0
        %v350 = vlaneseq
        %v351 = vshrl.u32 %v350, 7
        %v352 = vsub.s32 0, %v351
        %v353 = vrot.slane %v348, %v352
        %v354 = vlaneseq
        %v355 = vshrl.u32 %v354, 7
        %v356 = vsub.s32 0, %v355
        %v357 = vrot.slane %v349, %v356
        %vm358 = vcmp.eq.s32.totalorder %v353, 1
        %vm359 = vcmp.eq.s32.totalorder %v357, 1
        %v360 = vsel %vm358, %v331, 0.0
        %v361 = vsel %vm359, %v330, 0.0
        %s362 = scalar_lea.vmem %s231, 4
        %v363 = vld [vmem:[%s362] sm:$0xf]
        %v365 = vsel %vm245, %v363, 0
        %367 = vmatprep.subr.mxu0 %v252
        %368 = vmatpush1.msra.mxu0 %v250
        %369 = vmatprep.subr.mxu0 0.0
        %370 = vmatpush1.msra.mxu0 0.0
        %371 = vmatprep.subr.mxu0 0.0
        %372 = vmatpush1.msra.mxu0 0.0
        %373 = vmatprep.subr.mxu0 0.0
        %374 = vmatpush1.msra.mxu0 0.0
        %375 = vmatprep.subr.mxu0 0.0
        %376 = vmatpush1.msra.mxu0 0.0
        %377 = vmatprep.subr.mxu0 0.0
        %378 = vmatpush1.msra.mxu0 0.0
        %379 = vmatprep.subr.mxu0 0.0
        %380 = vmatpush1.msra.mxu0 0.0
        %381 = vmatprep.subr.mxu0 0.0
        %382 = vmatpush1.msra.mxu0 0.0
        %383 = vmatprep.subr.mxu0 0.0
        %384 = vmatpush1.msra.mxu0 0.0
        %385 = vmatprep.subr.mxu0 0.0
        %386 = vmatpush1.msra.mxu0 0.0
        %387 = vmatprep.subr.mxu0 0.0
        %388 = vmatpush1.msra.mxu0 0.0
        %389 = vmatprep.subr.mxu0 0.0
        %390 = vmatpush1.msra.mxu0 0.0
        %391 = vmatprep.subr.mxu0 0.0
        %392 = vmatpush1.msra.mxu0 0.0
        %393 = vmatprep.subr.mxu0 0.0
        %394 = vmatpush1.msra.mxu0 0.0
        %395 = vmatprep.subr.mxu0 0.0
        %396 = vmatpush1.msra.mxu0 0.0
        %397 = vmatprep.subr.mxu0 0.0
        %398 = vmatpush1.msra.mxu0 0.0
        %399 = vmatprep.subr.mxu0 0.0
        %400 = vmatpush1.msra.mxu0 0.0
        %401 = vmatprep.subr.mxu0 0.0
        %402 = vmatpush1.msra.mxu0 0.0
        %403 = vmatprep.subr.mxu0 0.0
        %404 = vmatpush1.msra.mxu0 0.0
        %405 = vmatprep.subr.mxu0 0.0
        %406 = vmatpush1.msra.mxu0 0.0
        %407 = vmatprep.subr.mxu0 0.0
        %408 = vmatpush1.msra.mxu0 0.0
        %409 = vmatprep.subr.mxu0 0.0
        %410 = vmatpush1.msra.mxu0 0.0
        %411 = vmatprep.subr.mxu0 0.0
        %412 = vmatpush1.msra.mxu0 0.0
        %413 = vmatprep.subr.mxu0 0.0
        %414 = vmatpush1.msra.mxu0 0.0
        %415 = vmatprep.subr.mxu0 0.0
        %416 = vmatpush1.msra.mxu0 0.0
        %417 = vmatprep.subr.mxu0 0.0
        %418 = vmatpush1.msra.mxu0 0.0
        %419 = vmatprep.subr.mxu0 0.0
        %420 = vmatpush1.msra.mxu0 0.0
        %421 = vmatprep.subr.mxu0 0.0
        %422 = vmatpush1.msra.mxu0 0.0
        %423 = vmatprep.subr.mxu0 0.0
        %424 = vmatpush1.msra.mxu0 0.0
        %425 = vmatprep.subr.mxu0 0.0
        %426 = vmatpush1.msra.mxu0 0.0
        %427 = vmatprep.subr.mxu0 0.0
        %428 = vmatpush1.msra.mxu0 0.0
        %429 = vmatprep.subr.mxu0 0.0
        %430 = vmatpush1.msra.mxu0 0.0
        %431 = vmatprep.mubr.f32.mxu0 0.0
        %432 = vmatmul.mubr.f32.gmra.mrb[0].mxu0 %v365
        %v433 = vpop.f32.mrb[0].mxu0
        %v434 = vadd.f32 0.0, %v433
        %v435 = vpop.f32.mrb[0].mxu0
        %v436 = vadd.f32 0.0, %v435
        %437 = vdwg.mxu0
        %438 = vrot.lane.b32.xlu0 %v434, 16
        %v439 = vpop.permute.xlu0 %438
        %440 = vrot.lane.b32.xlu0 %v436, 16
        %v441 = vpop.permute.xlu0 %440
        %vm442 = vcmp.lt.s32.totalorder %v238, 16
        %v443 = vsel %vm442, %v439, %v441
        %v444 = vsel %vm442, %v441, %v439
        %v445 = vsel %vm332, 1, 0
        %v446 = vsel %vm333, 1, 0
        %vm447 = vcmp.eq.s32.totalorder %v445, 1
        %vm448 = vcmp.eq.s32.totalorder %v446, 1
        %v449 = vsel %vm447, %v444, 0.0
        %v450 = vsel %vm448, %v443, 0.0
        %v451 = vadd.f32 %v360, %v449
        %v452 = vadd.f32 %v361, %v450
        %s453 = scalar_lea.vmem %s231, 8
        %v454 = vld [vmem:[%s453] sm:$0xf]
        %v456 = vsel %vm245, %v454, 0
        %458 = vmatprep.subr.mxu0 %v252
        %459 = vmatpush1.msra.mxu0 %v250
        %460 = vmatprep.subr.mxu0 0.0
        %461 = vmatpush1.msra.mxu0 0.0
        %462 = vmatprep.subr.mxu0 0.0
        %463 = vmatpush1.msra.mxu0 0.0
        %464 = vmatprep.subr.mxu0 0.0
        %465 = vmatpush1.msra.mxu0 0.0
        %466 = vmatprep.subr.mxu0 0.0
        %467 = vmatpush1.msra.mxu0 0.0
        %468 = vmatprep.subr.mxu0 0.0
        %469 = vmatpush1.msra.mxu0 0.0
        %470 = vmatprep.subr.mxu0 0.0
        %471 = vmatpush1.msra.mxu0 0.0
        %472 = vmatprep.subr.mxu0 0.0
        %473 = vmatpush1.msra.mxu0 0.0
        %474 = vmatprep.subr.mxu0 0.0
        %475 = vmatpush1.msra.mxu0 0.0
        %476 = vmatprep.subr.mxu0 0.0
        %477 = vmatpush1.msra.mxu0 0.0
        %478 = vmatprep.subr.mxu0 0.0
        %479 = vmatpush1.msra.mxu0 0.0
        %480 = vmatprep.subr.mxu0 0.0
        %481 = vmatpush1.msra.mxu0 0.0
        %482 = vmatprep.subr.mxu0 0.0
        %483 = vmatpush1.msra.mxu0 0.0
        %484 = vmatprep.subr.mxu0 0.0
        %485 = vmatpush1.msra.mxu0 0.0
        %486 = vmatprep.subr.mxu0 0.0
        %487 = vmatpush1.msra.mxu0 0.0
        %488 = vmatprep.subr.mxu0 0.0
        %489 = vmatpush1.msra.mxu0 0.0
        %490 = vmatprep.subr.mxu0 0.0
        %491 = vmatpush1.msra.mxu0 0.0
        %492 = vmatprep.subr.mxu0 0.0
        %493 = vmatpush1.msra.mxu0 0.0
        %494 = vmatprep.subr.mxu0 0.0
        %495 = vmatpush1.msra.mxu0 0.0
        %496 = vmatprep.subr.mxu0 0.0
        %497 = vmatpush1.msra.mxu0 0.0
        %498 = vmatprep.subr.mxu0 0.0
        %499 = vmatpush1.msra.mxu0 0.0
        %500 = vmatprep.subr.mxu0 0.0
        %501 = vmatpush1.msra.mxu0 0.0
        %502 = vmatprep.subr.mxu0 0.0
        %503 = vmatpush1.msra.mxu0 0.0
        %504 = vmatprep.subr.mxu0 0.0
        %505 = vmatpush1.msra.mxu0 0.0
        %506 = vmatprep.subr.mxu0 0.0
        %507 = vmatpush1.msra.mxu0 0.0
        %508 = vmatprep.subr.mxu0 0.0
        %509 = vmatpush1.msra.mxu0 0.0
        %510 = vmatprep.subr.mxu0 0.0
        %511 = vmatpush1.msra.mxu0 0.0
        %512 = vmatprep.subr.mxu0 0.0
        %513 = vmatpush1.msra.mxu0 0.0
        %514 = vmatprep.subr.mxu0 0.0
        %515 = vmatpush1.msra.mxu0 0.0
        %516 = vmatprep.subr.mxu0 0.0
        %517 = vmatpush1.msra.mxu0 0.0
        %518 = vmatprep.subr.mxu0 0.0
        %519 = vmatpush1.msra.mxu0 0.0
        %520 = vmatprep.subr.mxu0 0.0
        %521 = vmatpush1.msra.mxu0 0.0
        %522 = vmatprep.mubr.f32.mxu0 0.0
        %523 = vmatmul.mubr.f32.gmra.mrb[0].mxu0 %v456
        %v524 = vpop.f32.mrb[0].mxu0
        %v525 = vadd.f32 0.0, %v524
        %v526 = vpop.f32.mrb[0].mxu0
        %v527 = vadd.f32 0.0, %v526
        %528 = vdwg.mxu0
        %529 = vrot.lane.b32.xlu0 %v525, 15
        %v530 = vpop.permute.xlu0 %529
        %531 = vrot.lane.b32.xlu0 %v527, 15
        %v532 = vpop.permute.xlu0 %531
        %vm533 = vcmp.lt.s32.totalorder %v238, 15
        %v534 = vsel %vm533, %v530, %v532
        %v535 = vsel %vm533, %v532, %v530
        %vm536 = vcmp.lt.s32.totalorder %v240, 15
        %v537 = vsel %vm536, 1, 0
        %v538 = vlaneseq
        %v539 = vshrl.u32 %v538, 7
        %v540 = vsub.s32 0, %v539
        %v541 = vrot.slane %v537, %v540
        %v542 = vlaneseq
        %v543 = vshrl.u32 %v542, 7
        %v544 = vsub.s32 1, %v543
        %v545 = vrot.slane %v537, %v544
        %vm546 = vcmp.ne.s32.totalorder %v541, 0
        %vm547 = vcmp.ne.s32.totalorder %v545, 0
        %vm548 = vmand %vm332, %vm546
        %vm549 = vmand %vm333, %vm547
        %v550 = vsel %vm548, 1, 0
        %v551 = vsel %vm549, 1, 0
        %v552 = vlaneseq
        %v553 = vshrl.u32 %v552, 7
        %v554 = vsub.s32 0, %v553
        %v555 = vrot.slane %v550, %v554
        %v556 = vlaneseq
        %v557 = vshrl.u32 %v556, 7
        %v558 = vsub.s32 0, %v557
        %v559 = vrot.slane %v551, %v558
        %vm560 = vcmp.eq.s32.totalorder %v555, 1
        %vm561 = vcmp.eq.s32.totalorder %v559, 1
        %v562 = vsel %vm560, %v535, 0.0
        %v563 = vsel %vm561, %v534, 0.0
        %v564 = vadd.f32 %v451, %v562
        %v565 = vadd.f32 %v452, %v563
        %s566 = scalar_lea.vmem %s231, 12
        %v567 = vld [vmem:[%s566] sm:$0xf]
        %v569 = vsel %vm245, %v567, 0
        %571 = vmatprep.subr.mxu0 %v252
        %572 = vmatpush1.msra.mxu0 %v250
        %573 = vmatprep.subr.mxu0 0.0
        %574 = vmatpush1.msra.mxu0 0.0
        %575 = vmatprep.subr.mxu0 0.0
        %576 = vmatpush1.msra.mxu0 0.0
        %577 = vmatprep.subr.mxu0 0.0
        %578 = vmatpush1.msra.mxu0 0.0
        %579 = vmatprep.subr.mxu0 0.0
        %580 = vmatpush1.msra.mxu0 0.0
        %581 = vmatprep.subr.mxu0 0.0
        %582 = vmatpush1.msra.mxu0 0.0
        %583 = vmatprep.subr.mxu0 0.0
        %584 = vmatpush1.msra.mxu0 0.0
        %585 = vmatprep.subr.mxu0 0.0
        %586 = vmatpush1.msra.mxu0 0.0
        %587 = vmatprep.subr.mxu0 0.0
        %588 = vmatpush1.msra.mxu0 0.0
        %589 = vmatprep.subr.mxu0 0.0
        %590 = vmatpush1.msra.mxu0 0.0
        %591 = vmatprep.subr.mxu0 0.0
        %592 = vmatpush1.msra.mxu0 0.0
        %593 = vmatprep.subr.mxu0 0.0
        %594 = vmatpush1.msra.mxu0 0.0
        %595 = vmatprep.subr.mxu0 0.0
        %596 = vmatpush1.msra.mxu0 0.0
        %597 = vmatprep.subr.mxu0 0.0
        %598 = vmatpush1.msra.mxu0 0.0
        %599 = vmatprep.subr.mxu0 0.0
        %600 = vmatpush1.msra.mxu0 0.0
        %601 = vmatprep.subr.mxu0 0.0
        %602 = vmatpush1.msra.mxu0 0.0
        %603 = vmatprep.subr.mxu0 0.0
        %604 = vmatpush1.msra.mxu0 0.0
        %605 = vmatprep.subr.mxu0 0.0
        %606 = vmatpush1.msra.mxu0 0.0
        %607 = vmatprep.subr.mxu0 0.0
        %608 = vmatpush1.msra.mxu0 0.0
        %609 = vmatprep.subr.mxu0 0.0
        %610 = vmatpush1.msra.mxu0 0.0
        %611 = vmatprep.subr.mxu0 0.0
        %612 = vmatpush1.msra.mxu0 0.0
        %613 = vmatprep.subr.mxu0 0.0
        %614 = vmatpush1.msra.mxu0 0.0
        %615 = vmatprep.subr.mxu0 0.0
        %616 = vmatpush1.msra.mxu0 0.0
        %617 = vmatprep.subr.mxu0 0.0
        %618 = vmatpush1.msra.mxu0 0.0
        %619 = vmatprep.subr.mxu0 0.0
        %620 = vmatpush1.msra.mxu0 0.0
        %621 = vmatprep.subr.mxu0 0.0
        %622 = vmatpush1.msra.mxu0 0.0
        %623 = vmatprep.subr.mxu0 0.0
        %624 = vmatpush1.msra.mxu0 0.0
        %625 = vmatprep.subr.mxu0 0.0
        %626 = vmatpush1.msra.mxu0 0.0
        %627 = vmatprep.subr.mxu0 0.0
        %628 = vmatpush1.msra.mxu0 0.0
        %629 = vmatprep.subr.mxu0 0.0
        %630 = vmatpush1.msra.mxu0 0.0
        %631 = vmatprep.subr.mxu0 0.0
        %632 = vmatpush1.msra.mxu0 0.0
        %633 = vmatprep.subr.mxu0 0.0
        %634 = vmatpush1.msra.mxu0 0.0
        %635 = vmatprep.mubr.f32.mxu0 0.0
        %636 = vmatmul.mubr.f32.gmra.mrb[0].mxu0 %v569
        %v637 = vpop.f32.mrb[0].mxu0
        %v638 = vadd.f32 0.0, %v637
        %v639 = vpop.f32.mrb[0].mxu0
        %v640 = vadd.f32 0.0, %v639
        %641 = vdwg.mxu0
        %642 = vrot.lane.b32.xlu0 %v638, 1
        %v643 = vpop.permute.xlu0 %642
        %644 = vrot.lane.b32.xlu0 %v640, 1
        %v645 = vpop.permute.xlu0 %644
        %vm646 = vcmp.lt.s32.totalorder %v238, 1
        %v647 = vsel %vm646, %v643, %v645
        %v648 = vsel %vm646, %v645, %v643
        %vm649 = vcmp.eq.s32.totalorder %v339, 1
        %vm650 = vcmp.eq.s32.totalorder %v343, 1
        %v651 = vsel %vm649, %v648, 0.0
        %v652 = vsel %vm650, %v647, 0.0
        %v653 = vadd.f32 %v564, %v651
        %v654 = vadd.f32 %v565, %v652
        %s655 = scalar_lea.vmem %s231, 16
        %v656 = vld [vmem:[%s655] sm:$0xf]
        %v658 = vsel %vm245, %v656, 0
        %660 = vmatprep.subr.mxu0 %v252
        %661 = vmatpush1.msra.mxu0 %v250
        %662 = vmatprep.subr.mxu0 0.0
        %663 = vmatpush1.msra.mxu0 0.0
        %664 = vmatprep.subr.mxu0 0.0
        %665 = vmatpush1.msra.mxu0 0.0
        %666 = vmatprep.subr.mxu0 0.0
        %667 = vmatpush1.msra.mxu0 0.0
        %668 = vmatprep.subr.mxu0 0.0
        %669 = vmatpush1.msra.mxu0 0.0
        %670 = vmatprep.subr.mxu0 0.0
        %671 = vmatpush1.msra.mxu0 0.0
        %672 = vmatprep.subr.mxu0 0.0
        %673 = vmatpush1.msra.mxu0 0.0
        %674 = vmatprep.subr.mxu0 0.0
        %675 = vmatpush1.msra.mxu0 0.0
        %676 = vmatprep.subr.mxu0 0.0
        %677 = vmatpush1.msra.mxu0 0.0
        %678 = vmatprep.subr.mxu0 0.0
        %679 = vmatpush1.msra.mxu0 0.0
        %680 = vmatprep.subr.mxu0 0.0
        %681 = vmatpush1.msra.mxu0 0.0
        %682 = vmatprep.subr.mxu0 0.0
        %683 = vmatpush1.msra.mxu0 0.0
        %684 = vmatprep.subr.mxu0 0.0
        %685 = vmatpush1.msra.mxu0 0.0
        %686 = vmatprep.subr.mxu0 0.0
        %687 = vmatpush1.msra.mxu0 0.0
        %688 = vmatprep.subr.mxu0 0.0
        %689 = vmatpush1.msra.mxu0 0.0
        %690 = vmatprep.subr.mxu0 0.0
        %691 = vmatpush1.msra.mxu0 0.0
        %692 = vmatprep.subr.mxu0 0.0
        %693 = vmatpush1.msra.mxu0 0.0
        %694 = vmatprep.subr.mxu0 0.0
        %695 = vmatpush1.msra.mxu0 0.0
        %696 = vmatprep.subr.mxu0 0.0
        %697 = vmatpush1.msra.mxu0 0.0
        %698 = vmatprep.subr.mxu0 0.0
        %699 = vmatpush1.msra.mxu0 0.0
        %700 = vmatprep.subr.mxu0 0.0
        %701 = vmatpush1.msra.mxu0 0.0
        %702 = vmatprep.subr.mxu0 0.0
        %703 = vmatpush1.msra.mxu0 0.0
        %704 = vmatprep.subr.mxu0 0.0
        %705 = vmatpush1.msra.mxu0 0.0
        %706 = vmatprep.subr.mxu0 0.0
        %707 = vmatpush1.msra.mxu0 0.0
        %708 = vmatprep.subr.mxu0 0.0
        %709 = vmatpush1.msra.mxu0 0.0
        %710 = vmatprep.subr.mxu0 0.0
        %711 = vmatpush1.msra.mxu0 0.0
        %712 = vmatprep.subr.mxu0 0.0
        %713 = vmatpush1.msra.mxu0 0.0
        %714 = vmatprep.subr.mxu0 0.0
        %715 = vmatpush1.msra.mxu0 0.0
        %716 = vmatprep.subr.mxu0 0.0
        %717 = vmatpush1.msra.mxu0 0.0
        %718 = vmatprep.subr.mxu0 0.0
        %719 = vmatpush1.msra.mxu0 0.0
        %720 = vmatprep.subr.mxu0 0.0
        %721 = vmatpush1.msra.mxu0 0.0
        %722 = vmatprep.subr.mxu0 0.0
        %723 = vmatpush1.msra.mxu0 0.0
        %724 = vmatprep.mubr.f32.mxu0 0.0
        %725 = vmatmul.mubr.f32.gmra.mrb[0].mxu0 %v658
        %v726 = vpop.f32.mrb[0].mxu0
        %v727 = vadd.f32 0.0, %v726
        %v728 = vpop.f32.mrb[0].mxu0
        %v729 = vadd.f32 0.0, %v728
        %730 = vdwg.mxu0
        %v731 = vadd.f32 %v653, %v727
        %v732 = vadd.f32 %v654, %v729
        %s733 = scalar_lea.vmem %s231, 20
        %v734 = vld [vmem:[%s733] sm:$0xf]
        %v736 = vsel %vm245, %v734, 0
        %738 = vmatprep.subr.mxu0 %v252
        %739 = vmatpush1.msra.mxu0 %v250
        %740 = vmatprep.subr.mxu0 0.0
        %741 = vmatpush1.msra.mxu0 0.0
        %742 = vmatprep.subr.mxu0 0.0
        %743 = vmatpush1.msra.mxu0 0.0
        %744 = vmatprep.subr.mxu0 0.0
        %745 = vmatpush1.msra.mxu0 0.0
        %746 = vmatprep.subr.mxu0 0.0
        %747 = vmatpush1.msra.mxu0 0.0
        %748 = vmatprep.subr.mxu0 0.0
        %749 = vmatpush1.msra.mxu0 0.0
        %750 = vmatprep.subr.mxu0 0.0
        %751 = vmatpush1.msra.mxu0 0.0
        %752 = vmatprep.subr.mxu0 0.0
        %753 = vmatpush1.msra.mxu0 0.0
        %754 = vmatprep.subr.mxu0 0.0
        %755 = vmatpush1.msra.mxu0 0.0
        %756 = vmatprep.subr.mxu0 0.0
        %757 = vmatpush1.msra.mxu0 0.0
        %758 = vmatprep.subr.mxu0 0.0
        %759 = vmatpush1.msra.mxu0 0.0
        %760 = vmatprep.subr.mxu0 0.0
        %761 = vmatpush1.msra.mxu0 0.0
        %762 = vmatprep.subr.mxu0 0.0
        %763 = vmatpush1.msra.mxu0 0.0
        %764 = vmatprep.subr.mxu0 0.0
        %765 = vmatpush1.msra.mxu0 0.0
        %766 = vmatprep.subr.mxu0 0.0
        %767 = vmatpush1.msra.mxu0 0.0
        %768 = vmatprep.subr.mxu0 0.0
        %769 = vmatpush1.msra.mxu0 0.0
        %770 = vmatprep.subr.mxu0 0.0
        %771 = vmatpush1.msra.mxu0 0.0
        %772 = vmatprep.subr.mxu0 0.0
        %773 = vmatpush1.msra.mxu0 0.0
        %774 = vmatprep.subr.mxu0 0.0
        %775 = vmatpush1.msra.mxu0 0.0
        %776 = vmatprep.subr.mxu0 0.0
        %777 = vmatpush1.msra.mxu0 0.0
        %778 = vmatprep.subr.mxu0 0.0
        %779 = vmatpush1.msra.mxu0 0.0
        %780 = vmatprep.subr.mxu0 0.0
        %781 = vmatpush1.msra.mxu0 0.0
        %782 = vmatprep.subr.mxu0 0.0
        %783 = vmatpush1.msra.mxu0 0.0
        %784 = vmatprep.subr.mxu0 0.0
        %785 = vmatpush1.msra.mxu0 0.0
        %786 = vmatprep.subr.mxu0 0.0
        %787 = vmatpush1.msra.mxu0 0.0
        %788 = vmatprep.subr.mxu0 0.0
        %789 = vmatpush1.msra.mxu0 0.0
        %790 = vmatprep.subr.mxu0 0.0
        %791 = vmatpush1.msra.mxu0 0.0
        %792 = vmatprep.subr.mxu0 0.0
        %793 = vmatpush1.msra.mxu0 0.0
        %794 = vmatprep.subr.mxu0 0.0
        %795 = vmatpush1.msra.mxu0 0.0
        %796 = vmatprep.subr.mxu0 0.0
        %797 = vmatpush1.msra.mxu0 0.0
        %798 = vmatprep.subr.mxu0 0.0
        %799 = vmatpush1.msra.mxu0 0.0
        %800 = vmatprep.subr.mxu0 0.0
        %801 = vmatpush1.msra.mxu0 0.0
        %802 = vmatprep.mubr.f32.mxu0 0.0
        %803 = vmatmul.mubr.f32.gmra.mrb[0].mxu0 %v736
        %v804 = vpop.f32.mrb[0].mxu0
        %v805 = vadd.f32 0.0, %v804
        %v806 = vpop.f32.mrb[0].mxu0
        %v807 = vadd.f32 0.0, %v806
        %808 = vdwg.mxu0
        %809 = vrot.lane.b32.xlu0 %v805, 127
        %v810 = vpop.permute.xlu0 %809
        %811 = vrot.lane.b32.xlu0 %v807, 127
        %v812 = vpop.permute.xlu0 %811
        %vm813 = vcmp.lt.s32.totalorder %v238, 127
        %v814 = vsel %vm813, %v810, %v812
        %v815 = vsel %vm813, %v812, %v810
        %vm816 = vcmp.eq.s32.totalorder %v541, 1
        %vm817 = vcmp.eq.s32.totalorder %v545, 1
        %v818 = vsel %vm816, %v814, 0.0
        %v819 = vsel %vm817, %v815, 0.0
        %v820 = vadd.f32 %v731, %v818
        %v821 = vadd.f32 %v732, %v819
        %s822 = scalar_lea.vmem %s231, 24
        %v823 = vld [vmem:[%s822] sm:$0xf]
        %v825 = vsel %vm245, %v823, 0
        %827 = vmatprep.subr.mxu0 %v252
        %828 = vmatpush1.msra.mxu0 %v250
        %829 = vmatprep.subr.mxu0 0.0
        %830 = vmatpush1.msra.mxu0 0.0
        %831 = vmatprep.subr.mxu0 0.0
        %832 = vmatpush1.msra.mxu0 0.0
        %833 = vmatprep.subr.mxu0 0.0
        %834 = vmatpush1.msra.mxu0 0.0
        %835 = vmatprep.subr.mxu0 0.0
        %836 = vmatpush1.msra.mxu0 0.0
        %837 = vmatprep.subr.mxu0 0.0
        %838 = vmatpush1.msra.mxu0 0.0
        %839 = vmatprep.subr.mxu0 0.0
        %840 = vmatpush1.msra.mxu0 0.0
        %841 = vmatprep.subr.mxu0 0.0
        %842 = vmatpush1.msra.mxu0 0.0
        %843 = vmatprep.subr.mxu0 0.0
        %844 = vmatpush1.msra.mxu0 0.0
        %845 = vmatprep.subr.mxu0 0.0
        %846 = vmatpush1.msra.mxu0 0.0
        %847 = vmatprep.subr.mxu0 0.0
        %848 = vmatpush1.msra.mxu0 0.0
        %849 = vmatprep.subr.mxu0 0.0
        %850 = vmatpush1.msra.mxu0 0.0
        %851 = vmatprep.subr.mxu0 0.0
        %852 = vmatpush1.msra.mxu0 0.0
        %853 = vmatprep.subr.mxu0 0.0
        %854 = vmatpush1.msra.mxu0 0.0
        %855 = vmatprep.subr.mxu0 0.0
        %856 = vmatpush1.msra.mxu0 0.0
        %857 = vmatprep.subr.mxu0 0.0
        %858 = vmatpush1.msra.mxu0 0.0
        %859 = vmatprep.subr.mxu0 0.0
        %860 = vmatpush1.msra.mxu0 0.0
        %861 = vmatprep.subr.mxu0 0.0
        %862 = vmatpush1.msra.mxu0 0.0
        %863 = vmatprep.subr.mxu0 0.0
        %864 = vmatpush1.msra.mxu0 0.0
        %865 = vmatprep.subr.mxu0 0.0
        %866 = vmatpush1.msra.mxu0 0.0
        %867 = vmatprep.subr.mxu0 0.0
        %868 = vmatpush1.msra.mxu0 0.0
        %869 = vmatprep.subr.mxu0 0.0
        %870 = vmatpush1.msra.mxu0 0.0
        %871 = vmatprep.subr.mxu0 0.0
        %872 = vmatpush1.msra.mxu0 0.0
        %873 = vmatprep.subr.mxu0 0.0
        %874 = vmatpush1.msra.mxu0 0.0
        %875 = vmatprep.subr.mxu0 0.0
        %876 = vmatpush1.msra.mxu0 0.0
        %877 = vmatprep.subr.mxu0 0.0
        %878 = vmatpush1.msra.mxu0 0.0
        %879 = vmatprep.subr.mxu0 0.0
        %880 = vmatpush1.msra.mxu0 0.0
        %881 = vmatprep.subr.mxu0 0.0
        %882 = vmatpush1.msra.mxu0 0.0
        %883 = vmatprep.subr.mxu0 0.0
        %884 = vmatpush1.msra.mxu0 0.0
        %885 = vmatprep.subr.mxu0 0.0
        %886 = vmatpush1.msra.mxu0 0.0
        %887 = vmatprep.subr.mxu0 0.0
        %888 = vmatpush1.msra.mxu0 0.0
        %889 = vmatprep.subr.mxu0 0.0
        %890 = vmatpush1.msra.mxu0 0.0
        %891 = vmatprep.mubr.f32.mxu0 0.0
        %892 = vmatmul.mubr.f32.gmra.mrb[0].mxu0 %v825
        %v893 = vpop.f32.mrb[0].mxu0
        %v894 = vadd.f32 0.0, %v893
        %v895 = vpop.f32.mrb[0].mxu0
        %v896 = vadd.f32 0.0, %v895
        %897 = vdwg.mxu0
        %898 = vrot.lane.b32.xlu0 %v894, 113
        %v899 = vpop.permute.xlu0 %898
        %900 = vrot.lane.b32.xlu0 %v896, 113
        %v901 = vpop.permute.xlu0 %900
        %vm902 = vcmp.lt.s32.totalorder %v238, 113
        %v903 = vsel %vm902, %v899, %v901
        %v904 = vsel %vm902, %v901, %v899
        %vm905 = vcmp.lt.s32.totalorder %v238, 240
        %vm906 = vcmp.lt.s32.totalorder %v239, 240
        %vm907 = vmand %vm905, %vm344
        %vm908 = vmand %vm906, %vm345
        %v909 = vsel %vm907, 1, 0
        %v910 = vsel %vm908, 1, 0
        %v911 = vlaneseq
        %v912 = vshrl.u32 %v911, 7
        %v913 = vsub.s32 0, %v912
        %v914 = vrot.slane %v909, %v913
        %v915 = vlaneseq
        %v916 = vshrl.u32 %v915, 7
        %v917 = vsub.s32 0, %v916
        %v918 = vrot.slane %v910, %v917
        %vm919 = vcmp.eq.s32.totalorder %v914, 1
        %vm920 = vcmp.eq.s32.totalorder %v918, 1
        %v921 = vsel %vm919, %v903, 0.0
        %v922 = vsel %vm920, %v904, 0.0
        %v923 = vadd.f32 %v820, %v921
        %v924 = vadd.f32 %v821, %v922
        %s925 = scalar_lea.vmem %s231, 28
        %v926 = vld [vmem:[%s925] sm:$0xf]
        %v928 = vsel %vm245, %v926, 0
        %930 = vmatprep.subr.mxu0 %v252
        %931 = vmatpush1.msra.mxu0 %v250
        %932 = vmatprep.subr.mxu0 0.0
        %933 = vmatpush1.msra.mxu0 0.0
        %934 = vmatprep.subr.mxu0 0.0
        %935 = vmatpush1.msra.mxu0 0.0
        %936 = vmatprep.subr.mxu0 0.0
        %937 = vmatpush1.msra.mxu0 0.0
        %938 = vmatprep.subr.mxu0 0.0
        %939 = vmatpush1.msra.mxu0 0.0
        %940 = vmatprep.subr.mxu0 0.0
        %941 = vmatpush1.msra.mxu0 0.0
        %942 = vmatprep.subr.mxu0 0.0
        %943 = vmatpush1.msra.mxu0 0.0
        %944 = vmatprep.subr.mxu0 0.0
        %945 = vmatpush1.msra.mxu0 0.0
        %946 = vmatprep.subr.mxu0 0.0
        %947 = vmatpush1.msra.mxu0 0.0
        %948 = vmatprep.subr.mxu0 0.0
        %949 = vmatpush1.msra.mxu0 0.0
        %950 = vmatprep.subr.mxu0 0.0
        %951 = vmatpush1.msra.mxu0 0.0
        %952 = vmatprep.subr.mxu0 0.0
        %953 = vmatpush1.msra.mxu0 0.0
        %954 = vmatprep.subr.mxu0 0.0
        %955 = vmatpush1.msra.mxu0 0.0
        %956 = vmatprep.subr.mxu0 0.0
        %957 = vmatpush1.msra.mxu0 0.0
        %958 = vmatprep.subr.mxu0 0.0
        %959 = vmatpush1.msra.mxu0 0.0
        %960 = vmatprep.subr.mxu0 0.0
        %961 = vmatpush1.msra.mxu0 0.0
        %962 = vmatprep.subr.mxu0 0.0
        %963 = vmatpush1.msra.mxu0 0.0
        %964 = vmatprep.subr.mxu0 0.0
        %965 = vmatpush1.msra.mxu0 0.0
        %966 = vmatprep.subr.mxu0 0.0
        %967 = vmatpush1.msra.mxu0 0.0
        %968 = vmatprep.subr.mxu0 0.0
        %969 = vmatpush1.msra.mxu0 0.0
        %970 = vmatprep.subr.mxu0 0.0
        %971 = vmatpush1.msra.mxu0 0.0
        %972 = vmatprep.subr.mxu0 0.0
        %973 = vmatpush1.msra.mxu0 0.0
        %974 = vmatprep.subr.mxu0 0.0
        %975 = vmatpush1.msra.mxu0 0.0
        %976 = vmatprep.subr.mxu0 0.0
        %977 = vmatpush1.msra.mxu0 0.0
        %978 = vmatprep.subr.mxu0 0.0
        %979 = vmatpush1.msra.mxu0 0.0
        %980 = vmatprep.subr.mxu0 0.0
        %981 = vmatpush1.msra.mxu0 0.0
        %982 = vmatprep.subr.mxu0 0.0
        %983 = vmatpush1.msra.mxu0 0.0
        %984 = vmatprep.subr.mxu0 0.0
        %985 = vmatpush1.msra.mxu0 0.0
        %986 = vmatprep.subr.mxu0 0.0
        %987 = vmatpush1.msra.mxu0 0.0
        %988 = vmatprep.subr.mxu0 0.0
        %989 = vmatpush1.msra.mxu0 0.0
        %990 = vmatprep.subr.mxu0 0.0
        %991 = vmatpush1.msra.mxu0 0.0
        %992 = vmatprep.subr.mxu0 0.0
        %993 = vmatpush1.msra.mxu0 0.0
        %994 = vmatprep.mubr.f32.mxu0 0.0
        %995 = vmatmul.mubr.f32.gmra.mrb[0].mxu0 %v928
        %v996 = vpop.f32.mrb[0].mxu0
        %v997 = vadd.f32 0.0, %v996
        %v998 = vpop.f32.mrb[0].mxu0
        %v999 = vadd.f32 0.0, %v998
        %1000 = vdwg.mxu0
        %1001 = vrot.lane.b32.xlu0 %v997, 112
        %v1002 = vpop.permute.xlu0 %1001
        %1003 = vrot.lane.b32.xlu0 %v999, 112
        %v1004 = vpop.permute.xlu0 %1003
        %vm1005 = vcmp.lt.s32.totalorder %v238, 112
        %v1006 = vsel %vm1005, %v1002, %v1004
        %v1007 = vsel %vm1005, %v1004, %v1002
        %v1008 = vsel %vm905, 1, 0
        %v1009 = vsel %vm906, 1, 0
        %vm1010 = vcmp.eq.s32.totalorder %v1008, 1
        %vm1011 = vcmp.eq.s32.totalorder %v1009, 1
        %v1012 = vsel %vm1010, %v1006, 0.0
        %v1013 = vsel %vm1011, %v1007, 0.0
        %v1014 = vadd.f32 %v923, %v1012
        %v1015 = vadd.f32 %v924, %v1013
        %s1016 = scalar_lea.vmem %s231, 32
        %v1017 = vld [vmem:[%s1016] sm:$0xf]
        %v1019 = vsel %vm245, %v1017, 0
        %1021 = vmatprep.subr.mxu0 %v252
        %1022 = vmatpush1.msra.mxu0 %v250
        %1023 = vmatprep.subr.mxu0 0.0
        %1024 = vmatpush1.msra.mxu0 0.0
        %1025 = vmatprep.subr.mxu0 0.0
        %1026 = vmatpush1.msra.mxu0 0.0
        %1027 = vmatprep.subr.mxu0 0.0
        %1028 = vmatpush1.msra.mxu0 0.0
        %1029 = vmatprep.subr.mxu0 0.0
        %1030 = vmatpush1.msra.mxu0 0.0
        %1031 = vmatprep.subr.mxu0 0.0
        %1032 = vmatpush1.msra.mxu0 0.0
        %1033 = vmatprep.subr.mxu0 0.0
        %1034 = vmatpush1.msra.mxu0 0.0
        %1035 = vmatprep.subr.mxu0 0.0
        %1036 = vmatpush1.msra.mxu0 0.0
        %1037 = vmatprep.subr.mxu0 0.0
        %1038 = vmatpush1.msra.mxu0 0.0
        %1039 = vmatprep.subr.mxu0 0.0
        %1040 = vmatpush1.msra.mxu0 0.0
        %1041 = vmatprep.subr.mxu0 0.0
        %1042 = vmatpush1.msra.mxu0 0.0
        %1043 = vmatprep.subr.mxu0 0.0
        %1044 = vmatpush1.msra.mxu0 0.0
        %1045 = vmatprep.subr.mxu0 0.0
        %1046 = vmatpush1.msra.mxu0 0.0
        %1047 = vmatprep.subr.mxu0 0.0
        %1048 = vmatpush1.msra.mxu0 0.0
        %1049 = vmatprep.subr.mxu0 0.0
        %1050 = vmatpush1.msra.mxu0 0.0
        %1051 = vmatprep.subr.mxu0 0.0
        %1052 = vmatpush1.msra.mxu0 0.0
        %1053 = vmatprep.subr.mxu0 0.0
        %1054 = vmatpush1.msra.mxu0 0.0
        %1055 = vmatprep.subr.mxu0 0.0
        %1056 = vmatpush1.msra.mxu0 0.0
        %1057 = vmatprep.subr.mxu0 0.0
        %1058 = vmatpush1.msra.mxu0 0.0
        %1059 = vmatprep.subr.mxu0 0.0
        %1060 = vmatpush1.msra.mxu0 0.0
        %1061 = vmatprep.subr.mxu0 0.0
        %1062 = vmatpush1.msra.mxu0 0.0
        %1063 = vmatprep.subr.mxu0 0.0
        %1064 = vmatpush1.msra.mxu0 0.0
        %1065 = vmatprep.subr.mxu0 0.0
        %1066 = vmatpush1.msra.mxu0 0.0
        %1067 = vmatprep.subr.mxu0 0.0
        %1068 = vmatpush1.msra.mxu0 0.0
        %1069 = vmatprep.subr.mxu0 0.0
        %1070 = vmatpush1.msra.mxu0 0.0
        %1071 = vmatprep.subr.mxu0 0.0
        %1072 = vmatpush1.msra.mxu0 0.0
        %1073 = vmatprep.subr.mxu0 0.0
        %1074 = vmatpush1.msra.mxu0 0.0
        %1075 = vmatprep.subr.mxu0 0.0
        %1076 = vmatpush1.msra.mxu0 0.0
        %1077 = vmatprep.subr.mxu0 0.0
        %1078 = vmatpush1.msra.mxu0 0.0
        %1079 = vmatprep.subr.mxu0 0.0
        %1080 = vmatpush1.msra.mxu0 0.0
        %1081 = vmatprep.subr.mxu0 0.0
        %1082 = vmatpush1.msra.mxu0 0.0
        %1083 = vmatprep.subr.mxu0 0.0
        %1084 = vmatpush1.msra.mxu0 0.0
        %1085 = vmatprep.mubr.f32.mxu0 0.0
        %1086 = vmatmul.mubr.f32.gmra.mrb[0].mxu0 %v1019
        %v1087 = vpop.f32.mrb[0].mxu0
        %v1088 = vadd.f32 0.0, %v1087
        %v1089 = vpop.f32.mrb[0].mxu0
        %v1090 = vadd.f32 0.0, %v1089
        %1091 = vdwg.mxu0
        %1092 = vrot.lane.b32.xlu0 %v1088, 111
        %v1093 = vpop.permute.xlu0 %1092
        %1094 = vrot.lane.b32.xlu0 %v1090, 111
        %v1095 = vpop.permute.xlu0 %1094
        %vm1096 = vcmp.lt.s32.totalorder %v238, 111
        %v1097 = vsel %vm1096, %v1093, %v1095
        %v1098 = vsel %vm1096, %v1095, %v1093
        %vm1099 = vmand %vm905, %vm546
        %vm1100 = vmand %vm906, %vm547
        %v1101 = vsel %vm1099, 1, 0
        %v1102 = vsel %vm1100, 1, 0
        %v1103 = vlaneseq
        %v1104 = vshrl.u32 %v1103, 7
        %v1105 = vsub.s32 0, %v1104
        %v1106 = vrot.slane %v1101, %v1105
        %v1107 = vlaneseq
        %v1108 = vshrl.u32 %v1107, 7
        %v1109 = vsub.s32 0, %v1108
        %v1110 = vrot.slane %v1102, %v1109
        %vm1111 = vcmp.eq.s32.totalorder %v1106, 1
        %vm1112 = vcmp.eq.s32.totalorder %v1110, 1
        %v1113 = vsel %vm1111, %v1097, 0.0
        %v1114 = vsel %vm1112, %v1098, 0.0
        %v1115 = vadd.f32 %v1014, %v1113
        %v1116 = vadd.f32 %v1015, %v1114
        %v1117 = vld [vmem:[#allocation2] sm:$0xff]
        %v1120 = vcombine.low %v1115, %v1116
        %v1122 = vadd.f32 %v1117, %v1120
        %1123 = vst [vmem:[#allocation2] sm:$0xff] %v1122
        // Predicated region
        $region37: #{tpu_custom_call.1} parent=31 // pred_check
          %p1124 = pneg %p232
        $region38: #{tpu_custom_call.1} parent=31 // pred_check_branch
          %1126 = sbr.rel (%p1124) target = $region40
        $region39: #{tpu_custom_call.1} parent=31 // pred_region
          %v1127 = vld [vmem:[#allocation2] sm:$0xff]
          %v1129 = vcombine.high %v1127, %v1127
          %v1131 = vsel %vm249, %v1127, 0.0
          %v1132 = vsel %vm249, %v1129, 0.0
          %v1133 = vadd.f32 %v1131, %v1132
          %1134 = vadd.xlane.f32.xlu0 %v1133
          %v1135 = vpop.xlane.xlu0 %1134
          %v1136 = vmul.f32 %v1135, 0.00390625
          %v1139 = vunpack.c.l.s4 839922192
          %v1140 = vunpack.c.0.s8 %v1139
          %v1141 = vlaneseq
          %v1142 = vshrl.u32 %v1141, 7
          %v1143 = vsub.s32 %v1140, %v1142
          %v1144 = vrot.slane %v1136, %v1143
          %v1146 = vsub.f32 %v1127, %v1144
          %v1147 = vmul.f32 %v1146, %v1146
          %v1149 = vcombine.high %v1147, %v1147
          %v1151 = vsel %vm249, %v1147, 0.0
          %v1152 = vsel %vm249, %v1149, 0.0
          %v1153 = vadd.f32 %v1151, %v1152
          %1154 = vadd.xlane.f32.xlu0 %v1153
          %v1155 = vpop.xlane.xlu0 %1154
          %v1156 = vmul.f32 %v1155, 0.00390625
          %v1157 = vadd.f32 %v1156, 1e-05
          %v1158 = vrsqrt.pop %v1157
          %v1161 = vunpack.c.l.s4 839922192
          %v1162 = vunpack.c.0.s8 %v1161
          %v1163 = vlaneseq
          %v1164 = vshrl.u32 %v1163, 7
          %v1165 = vsub.s32 %v1162, %v1164
          %v1166 = vrot.slane %v1158, %v1165
          %v1168 = vmul.f32 %v1146, %v1166
          %1169 = vst [vmem:[%s215] sm:$0xff] %v1168
        $region40: #{tpu_custom_call.1} parent=31 // pred_fallthru
          _
        %s1170 = sand.u32 %s123, 1
        %s1171 = scalar_lea.sflag [#allocation4], %s1170
        %s1172 = sand.u32 %s123, 1
        %s1173 = smul.addr %s1172, 8
        %s1174 = scalar_lea.vmem [#allocation3], %s1173
        // Predicated region
        $region41: #{tpu_custom_call.1} parent=31 // pred_check
          %p1175 = pneg %p133
        $region42: #{tpu_custom_call.1} parent=31 // pred_check_branch
          %1177 = sbr.rel (%p1175) target = $region44
        $region43: #{tpu_custom_call.1} parent=31 // pred_region
          %s1179 = ssub.s32 128, 128
          %1180 = vsyncadd %s1171, %s1179
          %s1181 = smul.addr %s23, 2
          %s1182 = smul.addr %s22, 2
          %s1183 = sadd.s32 %s1181, %s1182
          %s1184 = smul.addr %s1183, 64
          %s1185 = scalar_lea.hbm %s3, %s1184
          %s1187 = sshll.u32 %s1174, 4
          %s1188 = int_to_ptr.vmem [resolvable:$true] %s1187
          %1190 = dma.vmem_to_hbm [thread:$0]  %s1188, 128, %s1185, %s1171
        $region44: #{tpu_custom_call.1} parent=31 // pred_fallthru
          _
      $region32: #{tpu_custom_call.1} parent=5 // pred_fallthru
        _
      %p1191 = scmp.le.s32.totalorder 2, %s12
      // Predicated region
      $region45: #{tpu_custom_call.1} parent=5 // pred_check
        %p1192 = pneg %p1191
      $region46: #{tpu_custom_call.1} parent=5 // pred_check_branch
        %1194 = sbr.rel (%p1192) target = $region48
      $region47: #{tpu_custom_call.1} parent=5 // pred_region
        %s1195 = ssub.s32 %s12, 2
        // Predicated region
        $region49: #{tpu_custom_call.1} parent=47 // pred_check
          %p1196 = pneg %p139
        $region50: #{tpu_custom_call.1} parent=47 // pred_check_branch
          %1198 = sbr.rel (%p1196) target = $region52
        $region51: #{tpu_custom_call.1} parent=47 // pred_region
          %s1199 = sand.u32 %s124, 1
          %s1200 = scalar_lea.sflag [#allocation4], %s1199
          %s1201 = sand.u32 %s124, 1
          %s1202 = smul.addr %s1201, 8
          %s1203 = scalar_lea.vmem [#allocation3], %s1202
          %1204 = dma.done %s1200, 128
        $region52: #{tpu_custom_call.1} parent=47 // pred_fallthru
          _
      $region48: #{tpu_custom_call.1} parent=5 // pred_fallthru
        _
    $region6: #{tpu_custom_call.1} parent=1 // loop_footer
      %s16 = sadd.s32 1, %s12
    $region7: #{tpu_custom_call.1} parent=1 // loop_footer_branch
      %11 = sbr.rel target = $region3
    $region8: #{tpu_custom_call.1} parent=1 // loop_exit
      _
    %1205 = vsyncpa [#allocation4], 1
    %s1206 = scalar_lea.sflag [#allocation4], 1
    %1207 = vsyncpa %s1206, 1

</llo_original>
